<compile_context>
chip_gen: v7x
topology: tpu7x:2x2x1
jax: 0.10.0
libtpu: 0.0.40
codegen_flags: <defaults>
</compile_context>

<pallas_src>
import functools

import jax
import jax.numpy as jnp
from jax.experimental import pallas as pl
from jax.experimental.pallas import tpu as pltpu


def _flatten_rows_to_lanes(x2d):
    """(R, L) -> (1, 1, R*L), row-major.

    Lane-axis concatenation of single-row slices; avoids a minor-dim-changing
    reshape.  Only used for small static R (the lane-dense toy-shape path).
    """
    r, l = x2d.shape
    flat = jnp.concatenate([x2d[i:i + 1, :] for i in range(r)], axis=1)
    return flat.reshape(1, 1, r * l)


def _atm_kernel(*refs, num_heads, scale, n_act):
    act_refs = refs[:n_act]
    w_ref, bp_ref, out_ref, attn_ref = refs[n_act:]

    xq_ref = act_refs[0]
    bb, nq, c = xq_ref.shape
    nk = act_refs[1].shape[1] if n_act > 1 else nq
    hd = c // num_heads
    cdt = w_ref.dtype                       # bf16 MXU compute dtype

    # ---- packed weights: one small load, static slices ----------------------
    w = w_ref[...]                          # (C, 4C): [Wq | Wk | Wv | Wproj]

    # ---- fused projections: M = bb*nq (bb*nk) rows per MXU pass -------------
    xq2 = xq_ref[...].reshape(bb * nq, c).astype(cdt)
    if n_act == 1:                          # xq is xk is xv -> one (M, 3C) matmul
        qkv = jnp.dot(xq2, w[:, :3 * c], preferred_element_type=jnp.float32)
        q, k, v = qkv[:, :c], qkv[:, c:2 * c], qkv[:, 2 * c:3 * c]
    elif n_act == 2:                        # xk is xv -> fused (M, 2C) k/v matmul
        xkv2 = act_refs[1][...].reshape(bb * nk, c).astype(cdt)
        q = jnp.dot(xq2, w[:, :c], preferred_element_type=jnp.float32)
        kv = jnp.dot(xkv2, w[:, c:3 * c], preferred_element_type=jnp.float32)
        k, v = kv[:, :c], kv[:, c:2 * c]
    else:
        xk2 = act_refs[1][...].reshape(bb * nk, c).astype(cdt)
        xv2 = act_refs[2][...].reshape(bb * nk, c).astype(cdt)
        q = jnp.dot(xq2, w[:, :c], preferred_element_type=jnp.float32)
        k = jnp.dot(xk2, w[:, c:2 * c], preferred_element_type=jnp.float32)
        v = jnp.dot(xv2, w[:, 2 * c:3 * c], preferred_element_type=jnp.float32)

    q3 = q.reshape(bb, nq, c).astype(cdt)
    k3 = k.reshape(bb, nk, c).astype(cdt)
    v3 = v.reshape(bb, nk, c).astype(cdt)
    wp = w[:, 3 * c:]                       # (C, C) projection weight

    # ---- per-head attention; output projection folded into the loop ---------
    attn_acc = jnp.zeros((bb, nq, nk), jnp.float32)   # sum over heads of logits
    out_acc = jnp.zeros((bb * nq, c), jnp.float32)    # projected output accum
    for h in range(num_heads):
        sl = slice(h * hd, (h + 1) * hd)
        logits = jnp.einsum("bqd,bkd->bqk", q3[:, :, sl], k3[:, :, sl],
                            preferred_element_type=jnp.float32) * scale
        attn_acc = attn_acc + logits
        m = jnp.max(logits, axis=-1, keepdims=True)
        p = jnp.exp(logits - m)
        denom = jnp.sum(p, axis=-1, keepdims=True)
        p = p * pl.reciprocal(denom, approx=True)     # EUP, not a VPU divide
        ctx_h = jnp.einsum("bqk,bkd->bqd", p.astype(cdt), v3[:, :, sl],
                           preferred_element_type=jnp.float32)
        # Per-head partial product over Wproj's K dim == concat-then-project.
        out_acc = out_acc + jnp.dot(
            ctx_h.reshape(bb * nq, hd).astype(cdt), wp[sl, :],
            preferred_element_type=jnp.float32)

    x = out_acc + bp_ref[...]                         # (bb*nq, C) + (1, C)
    attn = attn_acc * (1.0 / num_heads)

    # ---- stores: lane-dense flat slabs, or natural blocks when >=128 lanes --
    if out_ref.shape == (bb, nq, c):
        out_ref[...] = x.reshape(bb, nq, c).astype(out_ref.dtype)
    else:
        out_ref[...] = _flatten_rows_to_lanes(x).astype(out_ref.dtype)
    if attn_ref.shape == (bb, nq, nk):
        attn_ref[...] = attn.astype(attn_ref.dtype)
    else:
        attn_ref[...] = _flatten_rows_to_lanes(
            attn.reshape(bb * nq, nk)).astype(attn_ref.dtype)


def _estimate_vmem_bytes(n_act, block_b, nq, nk, c):
    """Rough per-grid-step VMEM resident set (f32 activations, bf16 weights)."""
    rows_q, rows_k = block_b * nq, block_b * nk
    act_in = 2 * (rows_q + (n_act - 1) * rows_k) * c * 4     # double-buffered inputs
    outs = 2 * (rows_q * c + rows_q * nk) * 4                # double-buffered outputs
    qkv = (rows_q + 2 * rows_k) * c * (4 + 2)                # f32 proj + bf16 copies
    attn_tmp = 3 * block_b * nq * nk * 4                     # logits / probs / accum
    weights = 2 * (c * 4 * c * 2 + c * 4)
    return act_in + outs + qkv + attn_tmp + weights


def atm_forward(xq, xk, xv, params, *, num_heads, qk_scale=None, block_b=None):
    B, Nq, C = xq.shape
    Nk = xk.shape[1]
    head_dim = C // num_heads
    # Faithful to the original module: head_dim ** (-5)  (NOT -0.5).
    scale = qk_scale if qk_scale is not None else float(head_dim) ** (-5)

    wq, wk, wv, wp, bp = params            # wq/wk/wv/wp: (C, C); bp: (1, C)

    # Pack the four weights into one bf16 (C, 4C) operand -> one tiny DMA.
    w_packed = jnp.concatenate([wq, wk, wv, wp], axis=1).astype(jnp.bfloat16)
    bp32 = bp.astype(jnp.float32).reshape(1, C)

    # Detect aliased activations so the kernel can fuse projection matmuls.
    if xq is xk and xk is xv:
        acts = [xq]
    elif xk is xv:
        acts = [xq, xk]
    else:
        acts = [xq, xk, xv]
    n_act = len(acts)

    # Batch-block: smallest divisor of B with M = block_b*Nq >= 256 MXU rows
    # (>=128 is enough on v5e) within a v7x-conservative VMEM budget; else the
    # largest divisor that fits.
    # TODO(synk): on v7x prefer an even grid (>=2) so both TensorCores get
    # batch blocks; on v5e/v6e prefer grid_b == 1 whenever the budget allows.
    if block_b is None:
        target_rows = 256
        budget = 32 * 1024 * 1024
        divisors = [d for d in range(1, B + 1) if B % d == 0]
        fitting = [d for d in divisors
                   if _estimate_vmem_bytes(n_act, d, Nq, Nk, C) <= budget] or [1]
        meeting = [d for d in fitting if d * Nq >= target_rows]
        block_b = meeting[0] if meeting else fitting[-1]
    assert B % block_b == 0, "block_b must divide B"
    grid_b = B // block_b
    rows = block_b * Nq

    # Lane-dense output layout: when the natural last dim is < 128 lanes the
    # kernel writes one flat (1, 1, rows*last) slab per step (unmasked stores)
    # and the wrapper reshapes back; otherwise keep the natural block.
    max_flat_rows = 64                      # keep the in-kernel row->lane fold small
    flat_out = C < 128 and rows <= max_flat_rows
    flat_attn = Nk < 128 and rows <= max_flat_rows

    if flat_out:
        out_struct = jax.ShapeDtypeStruct((grid_b, 1, rows * C), jnp.float32)
        out_spec = pl.BlockSpec((1, 1, rows * C), lambda b: (b, 0, 0))
    else:
        out_struct = jax.ShapeDtypeStruct((B, Nq, C), jnp.float32)
        out_spec = pl.BlockSpec((block_b, Nq, C), lambda b: (b, 0, 0))
    if flat_attn:
        attn_struct = jax.ShapeDtypeStruct((grid_b, 1, rows * Nk), jnp.float32)
        attn_spec = pl.BlockSpec((1, 1, rows * Nk), lambda b: (b, 0, 0))
    else:
        attn_struct = jax.ShapeDtypeStruct((B, Nq, Nk), jnp.float32)
        attn_spec = pl.BlockSpec((block_b, Nq, Nk), lambda b: (b, 0, 0))

    in_specs = ([pl.BlockSpec((block_b, a.shape[1], C), lambda b: (b, 0, 0))
                 for a in acts]
                + [pl.BlockSpec((C, 4 * C), lambda b: (0, 0)),
                   pl.BlockSpec((1, C), lambda b: (0, 0))])

    cp_kwargs = dict(dimension_semantics=("parallel",))
    est = _estimate_vmem_bytes(n_act, block_b, Nq, Nk, C)
    if est > 16 * 1024 * 1024:
        # Raise the scoped-VMEM limit, staying well under v7x's 64 MiB physical.
        cp_kwargs["vmem_limit_bytes"] = min(2 * est, 48 * 1024 * 1024)

    kernel = functools.partial(_atm_kernel, num_heads=num_heads, scale=scale,
                               n_act=n_act)

    # TODO(synk): past toy Nq/Nk/C, add an Nq grid axis (and an Nk axis with an
    # online-softmax accumulator) instead of growing block_b, and accept bf16
    # activations from upstream to halve input DMA bytes.
    out_raw, attn_raw = pl.pallas_call(
        kernel,
        out_shape=(out_struct, attn_struct),
        grid_spec=pltpu.PrefetchScalarGridSpec(
            num_scalar_prefetch=0,
            grid=(grid_b,),
            in_specs=in_specs,
            out_specs=[out_spec, attn_spec],
        ),
        compiler_params=pltpu.CompilerParams(**cp_kwargs),
    )(*acts, w_packed, bp32)

    out = out_raw.reshape(B, Nq, C) if flat_out else out_raw
    attn = attn_raw.reshape(B, Nq, Nk) if flat_attn else attn_raw
    return out, attn


def atm_reference(xq, xk, xv, params, *, num_heads, qk_scale=None):
    """Pure-JAX f32 reference mirroring the PyTorch forward."""
    B, Nq, C = xq.shape
    Nk = xk.shape[1]
    hd = C // num_heads
    scale = qk_scale if qk_scale is not None else float(hd) ** (-5)
    wq, wk, wv, wp, bp = params

    def split_heads(x, n):
        return x.reshape(B, n, num_heads, hd).transpose(0, 2, 1, 3)

    q = split_heads(xq @ wq, Nq)
    k = split_heads(xk @ wk, Nk)
    v = split_heads(xv @ wv, Nk)
    attn = jnp.einsum("bhqd,bhkd->bhqk", q, k) * scale
    attn_save = attn
    attn_sm = jax.nn.softmax(attn, axis=-1)
    x = jnp.einsum("bhqk,bhkd->bhqd", attn_sm, v)
    x = x.transpose(0, 2, 1, 3).reshape(B, Nq, C)
    x = x @ wp + jnp.reshape(bp, (1, C))
    return x, attn_save.sum(axis=1) / num_heads


if __name__ == "__main__":
    # Small shapes consistent with the module: dim=32, num_heads=4, head_dim=8.
    B, Nq, Nk, C, H = 2, 8, 8, 32, 4

    key = jax.random.PRNGKey(0)
    kxq, kxk, kxv, kwq, kwk, kwv, kwp, kbp = jax.random.split(key, 8)

    xq = jax.random.normal(kxq, (B, Nq, C), jnp.float32)
    xk = jax.random.normal(kxk, (B, Nk, C), jnp.float32)
    xv = jax.random.normal(kxv, (B, Nk, C), jnp.float32)

    # Deterministic parameters (qkv_bias=False -> no q/k/v bias; proj has bias).
    wscale = 1.0 / jnp.sqrt(jnp.float32(C))
    wq = jax.random.normal(kwq, (C, C), jnp.float32) * wscale
    wk = jax.random.normal(kwk, (C, C), jnp.float32) * wscale
    wv = jax.random.normal(kwv, (C, C), jnp.float32) * wscale
    wp = jax.random.normal(kwp, (C, C), jnp.float32) * wscale
    bp = jax.random.normal(kbp, (1, C), jnp.float32) * 0.1
    params = (wq, wk, wv, wp, bp)

    def check(xq_, xk_, xv_, tag):
        out, attn = atm_forward(xq_, xk_, xv_, params, num_heads=H)
        jax.block_until_ready((out, attn))
        out_r, attn_r = atm_reference(xq_, xk_, xv_, params, num_heads=H)
        # bf16 MXU operands (f32 accumulation) vs f32 reference -> loose tol.
        assert jnp.allclose(out, out_r, atol=5e-2, rtol=5e-2), (
            tag, "out max err", float(jnp.max(jnp.abs(out - out_r))))
        assert jnp.allclose(attn, attn_r, atol=5e-2, rtol=5e-2), (
            tag, "attn max err", float(jnp.max(jnp.abs(attn - attn_r))))

    check(xq, xk, xv, "cross")        # distinct q/k/v inputs   (n_act = 3)
    check(xq, xk, xk, "shared_kv")    # xk is xv -> fused k/v   (n_act = 2)
    check(xq, xq, xq, "self")         # xq is xk is xv -> fused (n_act = 1)

    print("KERNEL_OK")
</pallas_src>

<mosaic_0001>
module attributes {stable_mosaic.version = 11 : i64} {
  func.func @_atm_kernel(%arg0: i32, %arg1: memref<2x8x32xf32, #tpu.memory_space<vmem>>, %arg2: memref<2x8x32xf32, #tpu.memory_space<vmem>>, %arg3: memref<2x8x32xf32, #tpu.memory_space<vmem>>, %arg4: memref<32x128xbf16, #tpu.memory_space<vmem>>, %arg5: memref<1x32xf32, #tpu.memory_space<vmem>>, %arg6: memref<1x1x512xf32, #tpu.memory_space<vmem>>, %arg7: memref<1x1x128xf32, #tpu.memory_space<vmem>>) attributes {dimension_semantics = [#tpu.dimension_semantics<parallel>], iteration_bounds = array<i64: 1>, scalar_prefetch = 0 : i64, scratch_operands = 0 : i64, tpu.core_type = #tpu.core_type<tc>, window_params = [{transform_indices = @transform_0, window_bounds = array<i64: 2, 8, 32>}, {transform_indices = @transform_1, window_bounds = array<i64: 2, 8, 32>}, {transform_indices = @transform_2, window_bounds = array<i64: 2, 8, 32>}, {pipeline_mode = #tpu.pipeline_mode<synchronous>, transform_indices = @transform_3, window_bounds = array<i64: 32, 128>}, {pipeline_mode = #tpu.pipeline_mode<synchronous>, transform_indices = @transform_4, window_bounds = array<i64: 1, 32>}, {transform_indices = @transform_5, window_bounds = array<i64: 1, 1, 512>}, {transform_indices = @transform_6, window_bounds = array<i64: 1, 1, 128>}]} {
    %c0 = arith.constant 0 : index
    %c0_0 = arith.constant 0 : index
    %0 = vector.load %arg4[%c0, %c0_0] : memref<32x128xbf16, #tpu.memory_space<vmem>>, vector<32x128xbf16>
    %c0_1 = arith.constant 0 : index
    %c0_2 = arith.constant 0 : index
    %c0_3 = arith.constant 0 : index
    %1 = vector.load %arg1[%c0_1, %c0_2, %c0_3] : memref<2x8x32xf32, #tpu.memory_space<vmem>>, vector<2x8x32xf32>
    %2 = vector.shape_cast %1 : vector<2x8x32xf32> to vector<16x32xf32>
    %3 = arith.truncf %2 : vector<16x32xf32> to vector<16x32xbf16>
    %c0_4 = arith.constant 0 : index
    %c0_5 = arith.constant 0 : index
    %c0_6 = arith.constant 0 : index
    %4 = vector.load %arg2[%c0_4, %c0_5, %c0_6] : memref<2x8x32xf32, #tpu.memory_space<vmem>>, vector<2x8x32xf32>
    %5 = vector.shape_cast %4 : vector<2x8x32xf32> to vector<16x32xf32>
    %6 = arith.truncf %5 : vector<16x32xf32> to vector<16x32xbf16>
    %c0_7 = arith.constant 0 : index
    %c0_8 = arith.constant 0 : index
    %c0_9 = arith.constant 0 : index
    %7 = vector.load %arg3[%c0_7, %c0_8, %c0_9] : memref<2x8x32xf32, #tpu.memory_space<vmem>>, vector<2x8x32xf32>
    %8 = vector.shape_cast %7 : vector<2x8x32xf32> to vector<16x32xf32>
    %9 = arith.truncf %8 : vector<16x32xf32> to vector<16x32xbf16>
    %10 = vector.extract_strided_slice %0 {offsets = [0, 0], sizes = [32, 32], strides = [1, 1]} : vector<32x128xbf16> to vector<32x32xbf16>
    %cst = arith.constant dense<0.000000e+00> : vector<16x32xf32>
    %11 = tpu.matmul %3, %10, %cst {dimension_numbers = #tpu.dot_dimension_numbers<[1], [0], [0], [1], [0, 0, 1, 1], [], []>} : vector<16x32xbf16>, vector<32x32xbf16>, vector<16x32xf32> -> vector<16x32xf32>
    %12 = vector.extract_strided_slice %0 {offsets = [0, 32], sizes = [32, 32], strides = [1, 1]} : vector<32x128xbf16> to vector<32x32xbf16>
    %cst_10 = arith.constant dense<0.000000e+00> : vector<16x32xf32>
    %13 = tpu.matmul %6, %12, %cst_10 {dimension_numbers = #tpu.dot_dimension_numbers<[1], [0], [0], [1], [0, 0, 1, 1], [], []>} : vector<16x32xbf16>, vector<32x32xbf16>, vector<16x32xf32> -> vector<16x32xf32>
    %14 = vector.extract_strided_slice %0 {offsets = [0, 64], sizes = [32, 32], strides = [1, 1]} : vector<32x128xbf16> to vector<32x32xbf16>
    %cst_11 = arith.constant dense<0.000000e+00> : vector<16x32xf32>
    %15 = tpu.matmul %9, %14, %cst_11 {dimension_numbers = #tpu.dot_dimension_numbers<[1], [0], [0], [1], [0, 0, 1, 1], [], []>} : vector<16x32xbf16>, vector<32x32xbf16>, vector<16x32xf32> -> vector<16x32xf32>
    %16 = vector.shape_cast %11 : vector<16x32xf32> to vector<2x8x32xf32>
    %17 = arith.truncf %16 : vector<2x8x32xf32> to vector<2x8x32xbf16>
    %18 = vector.shape_cast %13 : vector<16x32xf32> to vector<2x8x32xf32>
    %19 = arith.truncf %18 : vector<2x8x32xf32> to vector<2x8x32xbf16>
    %20 = vector.shape_cast %15 : vector<16x32xf32> to vector<2x8x32xf32>
    %21 = arith.truncf %20 : vector<2x8x32xf32> to vector<2x8x32xbf16>
    %22 = vector.extract_strided_slice %0 {offsets = [0, 96], sizes = [32, 32], strides = [1, 1]} : vector<32x128xbf16> to vector<32x32xbf16>
    %cst_12 = arith.constant 0.000000e+00 : f32
    %23 = vector.broadcast %cst_12 : f32 to vector<2x8x8xf32>
    %cst_13 = arith.constant 0.000000e+00 : f32
    %24 = vector.broadcast %cst_13 : f32 to vector<16x32xf32>
    %25 = vector.extract_strided_slice %17 {offsets = [0, 0, 0], sizes = [2, 8, 8], strides = [1, 1, 1]} : vector<2x8x32xbf16> to vector<2x8x8xbf16>
    %26 = vector.extract_strided_slice %19 {offsets = [0, 0, 0], sizes = [2, 8, 8], strides = [1, 1, 1]} : vector<2x8x32xbf16> to vector<2x8x8xbf16>
    "tpu.trace_start"() <{level = 10 : i32, message = "bqd,bkd->bqk"}> : () -> ()
    %cst_14 = arith.constant dense<0.000000e+00> : vector<2x8x8xf32>
    %27 = tpu.matmul %25, %26, %cst_14 {dimension_numbers = #tpu.dot_dimension_numbers<[2], [2], [1], [1], [0, 0, 0, 1, 1, 1], [0], [0]>} : vector<2x8x8xbf16>, vector<2x8x8xbf16>, vector<2x8x8xf32> -> vector<2x8x8xf32>
    "tpu.trace_stop"() : () -> ()
    %cst_15 = arith.constant 3.05175781E-5 : f32
    %28 = vector.broadcast %cst_15 : f32 to vector<2x8x8xf32>
    %29 = arith.mulf %27, %28 : vector<2x8x8xf32>
    %30 = arith.addf %23, %29 : vector<2x8x8xf32>
    %cst_16 = arith.constant dense<0xFF800000> : vector<2x8xf32>
    %31 = vector.multi_reduction <maximumf>, %29, %cst_16 [2] : vector<2x8x8xf32> to vector<2x8xf32>
    %32 = vector.shape_cast %31 : vector<2x8xf32> to vector<2x8x1xf32>
    %33 = vector.broadcast %32 : vector<2x8x1xf32> to vector<2x8x8xf32>
    %34 = arith.subf %29, %33 : vector<2x8x8xf32>
    %35 = math.exp %34 : vector<2x8x8xf32>
    %cst_17 = arith.constant dense<0.000000e+00> : vector<2x8xf32>
    %36 = vector.multi_reduction <add>, %35, %cst_17 [2] : vector<2x8x8xf32> to vector<2x8xf32>
    %37 = vector.shape_cast %36 : vector<2x8xf32> to vector<2x8x1xf32>
    %38 = tpu.reciprocal %37 {approx = true} : vector<2x8x1xf32> -> vector<2x8x1xf32>
    %39 = vector.broadcast %38 : vector<2x8x1xf32> to vector<2x8x8xf32>
    %40 = arith.mulf %35, %39 : vector<2x8x8xf32>
    %41 = arith.truncf %40 : vector<2x8x8xf32> to vector<2x8x8xbf16>
    %42 = vector.extract_strided_slice %21 {offsets = [0, 0, 0], sizes = [2, 8, 8], strides = [1, 1, 1]} : vector<2x8x32xbf16> to vector<2x8x8xbf16>
    "tpu.trace_start"() <{level = 10 : i32, message = "bqk,bkd->bqd"}> : () -> ()
    %cst_18 = arith.constant dense<0.000000e+00> : vector<2x8x8xf32>
    %43 = tpu.matmul %41, %42, %cst_18 {dimension_numbers = #tpu.dot_dimension_numbers<[2], [1], [1], [2], [0, 0, 0, 1, 1, 2], [0], [0]>} : vector<2x8x8xbf16>, vector<2x8x8xbf16>, vector<2x8x8xf32> -> vector<2x8x8xf32>
    "tpu.trace_stop"() : () -> ()
    %44 = vector.shape_cast %43 : vector<2x8x8xf32> to vector<16x8xf32>
    %45 = arith.truncf %44 : vector<16x8xf32> to vector<16x8xbf16>
    %46 = vector.extract_strided_slice %22 {offsets = [0, 0], sizes = [8, 32], strides = [1, 1]} : vector<32x32xbf16> to vector<8x32xbf16>
    %cst_19 = arith.constant dense<0.000000e+00> : vector<16x32xf32>
    %47 = tpu.matmul %45, %46, %cst_19 {dimension_numbers = #tpu.dot_dimension_numbers<[1], [0], [0], [1], [0, 0, 1, 1], [], []>} : vector<16x8xbf16>, vector<8x32xbf16>, vector<16x32xf32> -> vector<16x32xf32>
    %48 = arith.addf %24, %47 : vector<16x32xf32>
    %49 = vector.extract_strided_slice %17 {offsets = [0, 0, 8], sizes = [2, 8, 8], strides = [1, 1, 1]} : vector<2x8x32xbf16> to vector<2x8x8xbf16>
    %50 = vector.extract_strided_slice %19 {offsets = [0, 0, 8], sizes = [2, 8, 8], strides = [1, 1, 1]} : vector<2x8x32xbf16> to vector<2x8x8xbf16>
    "tpu.trace_start"() <{level = 10 : i32, message = "bqd,bkd->bqk"}> : () -> ()
    %cst_20 = arith.constant dense<0.000000e+00> : vector<2x8x8xf32>
    %51 = tpu.matmul %49, %50, %cst_20 {dimension_numbers = #tpu.dot_dimension_numbers<[2], [2], [1], [1], [0, 0, 0, 1, 1, 1], [0], [0]>} : vector<2x8x8xbf16>, vector<2x8x8xbf16>, vector<2x8x8xf32> -> vector<2x8x8xf32>
    "tpu.trace_stop"() : () -> ()
    %cst_21 = arith.constant 3.05175781E-5 : f32
    %52 = vector.broadcast %cst_21 : f32 to vector<2x8x8xf32>
    %53 = arith.mulf %51, %52 : vector<2x8x8xf32>
    %54 = arith.addf %30, %53 : vector<2x8x8xf32>
    %cst_22 = arith.constant dense<0xFF800000> : vector<2x8xf32>
    %55 = vector.multi_reduction <maximumf>, %53, %cst_22 [2] : vector<2x8x8xf32> to vector<2x8xf32>
    %56 = vector.shape_cast %55 : vector<2x8xf32> to vector<2x8x1xf32>
    %57 = vector.broadcast %56 : vector<2x8x1xf32> to vector<2x8x8xf32>
    %58 = arith.subf %53, %57 : vector<2x8x8xf32>
    %59 = math.exp %58 : vector<2x8x8xf32>
    %cst_23 = arith.constant dense<0.000000e+00> : vector<2x8xf32>
    %60 = vector.multi_reduction <add>, %59, %cst_23 [2] : vector<2x8x8xf32> to vector<2x8xf32>
    %61 = vector.shape_cast %60 : vector<2x8xf32> to vector<2x8x1xf32>
    %62 = tpu.reciprocal %61 {approx = true} : vector<2x8x1xf32> -> vector<2x8x1xf32>
    %63 = vector.broadcast %62 : vector<2x8x1xf32> to vector<2x8x8xf32>
    %64 = arith.mulf %59, %63 : vector<2x8x8xf32>
    %65 = arith.truncf %64 : vector<2x8x8xf32> to vector<2x8x8xbf16>
    %66 = vector.extract_strided_slice %21 {offsets = [0, 0, 8], sizes = [2, 8, 8], strides = [1, 1, 1]} : vector<2x8x32xbf16> to vector<2x8x8xbf16>
    "tpu.trace_start"() <{level = 10 : i32, message = "bqk,bkd->bqd"}> : () -> ()
    %cst_24 = arith.constant dense<0.000000e+00> : vector<2x8x8xf32>
    %67 = tpu.matmul %65, %66, %cst_24 {dimension_numbers = #tpu.dot_dimension_numbers<[2], [1], [1], [2], [0, 0, 0, 1, 1, 2], [0], [0]>} : vector<2x8x8xbf16>, vector<2x8x8xbf16>, vector<2x8x8xf32> -> vector<2x8x8xf32>
    "tpu.trace_stop"() : () -> ()
    %68 = vector.shape_cast %67 : vector<2x8x8xf32> to vector<16x8xf32>
    %69 = arith.truncf %68 : vector<16x8xf32> to vector<16x8xbf16>
    %70 = vector.extract_strided_slice %22 {offsets = [8, 0], sizes = [8, 32], strides = [1, 1]} : vector<32x32xbf16> to vector<8x32xbf16>
    %cst_25 = arith.constant dense<0.000000e+00> : vector<16x32xf32>
    %71 = tpu.matmul %69, %70, %cst_25 {dimension_numbers = #tpu.dot_dimension_numbers<[1], [0], [0], [1], [0, 0, 1, 1], [], []>} : vector<16x8xbf16>, vector<8x32xbf16>, vector<16x32xf32> -> vector<16x32xf32>
    %72 = arith.addf %48, %71 : vector<16x32xf32>
    %73 = vector.extract_strided_slice %17 {offsets = [0, 0, 16], sizes = [2, 8, 8], strides = [1, 1, 1]} : vector<2x8x32xbf16> to vector<2x8x8xbf16>
    %74 = vector.extract_strided_slice %19 {offsets = [0, 0, 16], sizes = [2, 8, 8], strides = [1, 1, 1]} : vector<2x8x32xbf16> to vector<2x8x8xbf16>
    "tpu.trace_start"() <{level = 10 : i32, message = "bqd,bkd->bqk"}> : () -> ()
    %cst_26 = arith.constant dense<0.000000e+00> : vector<2x8x8xf32>
    %75 = tpu.matmul %73, %74, %cst_26 {dimension_numbers = #tpu.dot_dimension_numbers<[2], [2], [1], [1], [0, 0, 0, 1, 1, 1], [0], [0]>} : vector<2x8x8xbf16>, vector<2x8x8xbf16>, vector<2x8x8xf32> -> vector<2x8x8xf32>
    "tpu.trace_stop"() : () -> ()
    %cst_27 = arith.constant 3.05175781E-5 : f32
    %76 = vector.broadcast %cst_27 : f32 to vector<2x8x8xf32>
    %77 = arith.mulf %75, %76 : vector<2x8x8xf32>
    %78 = arith.addf %54, %77 : vector<2x8x8xf32>
    %cst_28 = arith.constant dense<0xFF800000> : vector<2x8xf32>
    %79 = vector.multi_reduction <maximumf>, %77, %cst_28 [2] : vector<2x8x8xf32> to vector<2x8xf32>
    %80 = vector.shape_cast %79 : vector<2x8xf32> to vector<2x8x1xf32>
    %81 = vector.broadcast %80 : vector<2x8x1xf32> to vector<2x8x8xf32>
    %82 = arith.subf %77, %81 : vector<2x8x8xf32>
    %83 = math.exp %82 : vector<2x8x8xf32>
    %cst_29 = arith.constant dense<0.000000e+00> : vector<2x8xf32>
    %84 = vector.multi_reduction <add>, %83, %cst_29 [2] : vector<2x8x8xf32> to vector<2x8xf32>
    %85 = vector.shape_cast %84 : vector<2x8xf32> to vector<2x8x1xf32>
    %86 = tpu.reciprocal %85 {approx = true} : vector<2x8x1xf32> -> vector<2x8x1xf32>
    %87 = vector.broadcast %86 : vector<2x8x1xf32> to vector<2x8x8xf32>
    %88 = arith.mulf %83, %87 : vector<2x8x8xf32>
    %89 = arith.truncf %88 : vector<2x8x8xf32> to vector<2x8x8xbf16>
    %90 = vector.extract_strided_slice %21 {offsets = [0, 0, 16], sizes = [2, 8, 8], strides = [1, 1, 1]} : vector<2x8x32xbf16> to vector<2x8x8xbf16>
    "tpu.trace_start"() <{level = 10 : i32, message = "bqk,bkd->bqd"}> : () -> ()
    %cst_30 = arith.constant dense<0.000000e+00> : vector<2x8x8xf32>
    %91 = tpu.matmul %89, %90, %cst_30 {dimension_numbers = #tpu.dot_dimension_numbers<[2], [1], [1], [2], [0, 0, 0, 1, 1, 2], [0], [0]>} : vector<2x8x8xbf16>, vector<2x8x8xbf16>, vector<2x8x8xf32> -> vector<2x8x8xf32>
    "tpu.trace_stop"() : () -> ()
    %92 = vector.shape_cast %91 : vector<2x8x8xf32> to vector<16x8xf32>
    %93 = arith.truncf %92 : vector<16x8xf32> to vector<16x8xbf16>
    %94 = vector.extract_strided_slice %22 {offsets = [16, 0], sizes = [8, 32], strides = [1, 1]} : vector<32x32xbf16> to vector<8x32xbf16>
    %cst_31 = arith.constant dense<0.000000e+00> : vector<16x32xf32>
    %95 = tpu.matmul %93, %94, %cst_31 {dimension_numbers = #tpu.dot_dimension_numbers<[1], [0], [0], [1], [0, 0, 1, 1], [], []>} : vector<16x8xbf16>, vector<8x32xbf16>, vector<16x32xf32> -> vector<16x32xf32>
    %96 = arith.addf %72, %95 : vector<16x32xf32>
    %97 = vector.extract_strided_slice %17 {offsets = [0, 0, 24], sizes = [2, 8, 8], strides = [1, 1, 1]} : vector<2x8x32xbf16> to vector<2x8x8xbf16>
    %98 = vector.extract_strided_slice %19 {offsets = [0, 0, 24], sizes = [2, 8, 8], strides = [1, 1, 1]} : vector<2x8x32xbf16> to vector<2x8x8xbf16>
    "tpu.trace_start"() <{level = 10 : i32, message = "bqd,bkd->bqk"}> : () -> ()
    %cst_32 = arith.constant dense<0.000000e+00> : vector<2x8x8xf32>
    %99 = tpu.matmul %97, %98, %cst_32 {dimension_numbers = #tpu.dot_dimension_numbers<[2], [2], [1], [1], [0, 0, 0, 1, 1, 1], [0], [0]>} : vector<2x8x8xbf16>, vector<2x8x8xbf16>, vector<2x8x8xf32> -> vector<2x8x8xf32>
    "tpu.trace_stop"() : () -> ()
    %cst_33 = arith.constant 3.05175781E-5 : f32
    %100 = vector.broadcast %cst_33 : f32 to vector<2x8x8xf32>
    %101 = arith.mulf %99, %100 : vector<2x8x8xf32>
    %102 = arith.addf %78, %101 : vector<2x8x8xf32>
    %cst_34 = arith.constant dense<0xFF800000> : vector<2x8xf32>
    %103 = vector.multi_reduction <maximumf>, %101, %cst_34 [2] : vector<2x8x8xf32> to vector<2x8xf32>
    %104 = vector.shape_cast %103 : vector<2x8xf32> to vector<2x8x1xf32>
    %105 = vector.broadcast %104 : vector<2x8x1xf32> to vector<2x8x8xf32>
    %106 = arith.subf %101, %105 : vector<2x8x8xf32>
    %107 = math.exp %106 : vector<2x8x8xf32>
    %cst_35 = arith.constant dense<0.000000e+00> : vector<2x8xf32>
    %108 = vector.multi_reduction <add>, %107, %cst_35 [2] : vector<2x8x8xf32> to vector<2x8xf32>
    %109 = vector.shape_cast %108 : vector<2x8xf32> to vector<2x8x1xf32>
    %110 = tpu.reciprocal %109 {approx = true} : vector<2x8x1xf32> -> vector<2x8x1xf32>
    %111 = vector.broadcast %110 : vector<2x8x1xf32> to vector<2x8x8xf32>
    %112 = arith.mulf %107, %111 : vector<2x8x8xf32>
    %113 = arith.truncf %112 : vector<2x8x8xf32> to vector<2x8x8xbf16>
    %114 = vector.extract_strided_slice %21 {offsets = [0, 0, 24], sizes = [2, 8, 8], strides = [1, 1, 1]} : vector<2x8x32xbf16> to vector<2x8x8xbf16>
    "tpu.trace_start"() <{level = 10 : i32, message = "bqk,bkd->bqd"}> : () -> ()
    %cst_36 = arith.constant dense<0.000000e+00> : vector<2x8x8xf32>
    %115 = tpu.matmul %113, %114, %cst_36 {dimension_numbers = #tpu.dot_dimension_numbers<[2], [1], [1], [2], [0, 0, 0, 1, 1, 2], [0], [0]>} : vector<2x8x8xbf16>, vector<2x8x8xbf16>, vector<2x8x8xf32> -> vector<2x8x8xf32>
    "tpu.trace_stop"() : () -> ()
    %116 = vector.shape_cast %115 : vector<2x8x8xf32> to vector<16x8xf32>
    %117 = arith.truncf %116 : vector<16x8xf32> to vector<16x8xbf16>
    %118 = vector.extract_strided_slice %22 {offsets = [24, 0], sizes = [8, 32], strides = [1, 1]} : vector<32x32xbf16> to vector<8x32xbf16>
    %cst_37 = arith.constant dense<0.000000e+00> : vector<16x32xf32>
    %119 = tpu.matmul %117, %118, %cst_37 {dimension_numbers = #tpu.dot_dimension_numbers<[1], [0], [0], [1], [0, 0, 1, 1], [], []>} : vector<16x8xbf16>, vector<8x32xbf16>, vector<16x32xf32> -> vector<16x32xf32>
    %120 = arith.addf %96, %119 : vector<16x32xf32>
    %c0_38 = arith.constant 0 : index
    %c0_39 = arith.constant 0 : index
    %121 = vector.load %arg5[%c0_38, %c0_39] : memref<1x32xf32, #tpu.memory_space<vmem>>, vector<1x32xf32>
    %122 = vector.broadcast %121 : vector<1x32xf32> to vector<16x32xf32>
    %123 = arith.addf %120, %122 : vector<16x32xf32>
    %cst_40 = arith.constant 2.500000e-01 : f32
    %124 = vector.broadcast %cst_40 : f32 to vector<2x8x8xf32>
    %125 = arith.mulf %102, %124 : vector<2x8x8xf32>
    %126 = vector.extract_strided_slice %123 {offsets = [0, 0], sizes = [1, 32], strides = [1, 1]} : vector<16x32xf32> to vector<1x32xf32>
    %127 = vector.extract_strided_slice %123 {offsets = [1, 0], sizes = [1, 32], strides = [1, 1]} : vector<16x32xf32> to vector<1x32xf32>
    %128 = vector.extract_strided_slice %123 {offsets = [2, 0], sizes = [1, 32], strides = [1, 1]} : vector<16x32xf32> to vector<1x32xf32>
    %129 = vector.extract_strided_slice %123 {offsets = [3, 0], sizes = [1, 32], strides = [1, 1]} : vector<16x32xf32> to vector<1x32xf32>
    %130 = vector.extract_strided_slice %123 {offsets = [4, 0], sizes = [1, 32], strides = [1, 1]} : vector<16x32xf32> to vector<1x32xf32>
    %131 = vector.extract_strided_slice %123 {offsets = [5, 0], sizes = [1, 32], strides = [1, 1]} : vector<16x32xf32> to vector<1x32xf32>
    %132 = vector.extract_strided_slice %123 {offsets = [6, 0], sizes = [1, 32], strides = [1, 1]} : vector<16x32xf32> to vector<1x32xf32>
    %133 = vector.extract_strided_slice %123 {offsets = [7, 0], sizes = [1, 32], strides = [1, 1]} : vector<16x32xf32> to vector<1x32xf32>
    %134 = vector.extract_strided_slice %123 {offsets = [8, 0], sizes = [1, 32], strides = [1, 1]} : vector<16x32xf32> to vector<1x32xf32>
    %135 = vector.extract_strided_slice %123 {offsets = [9, 0], sizes = [1, 32], strides = [1, 1]} : vector<16x32xf32> to vector<1x32xf32>
    %136 = vector.extract_strided_slice %123 {offsets = [10, 0], sizes = [1, 32], strides = [1, 1]} : vector<16x32xf32> to vector<1x32xf32>
    %137 = vector.extract_strided_slice %123 {offsets = [11, 0], sizes = [1, 32], strides = [1, 1]} : vector<16x32xf32> to vector<1x32xf32>
    %138 = vector.extract_strided_slice %123 {offsets = [12, 0], sizes = [1, 32], strides = [1, 1]} : vector<16x32xf32> to vector<1x32xf32>
    %139 = vector.extract_strided_slice %123 {offsets = [13, 0], sizes = [1, 32], strides = [1, 1]} : vector<16x32xf32> to vector<1x32xf32>
    %140 = vector.extract_strided_slice %123 {offsets = [14, 0], sizes = [1, 32], strides = [1, 1]} : vector<16x32xf32> to vector<1x32xf32>
    %141 = vector.extract_strided_slice %123 {offsets = [15, 0], sizes = [1, 32], strides = [1, 1]} : vector<16x32xf32> to vector<1x32xf32>
    %142 = tpu.concatenate %126, %127, %128, %129, %130, %131, %132, %133, %134, %135, %136, %137, %138, %139, %140, %141 in 1 : vector<1x32xf32>, vector<1x32xf32>, vector<1x32xf32>, vector<1x32xf32>, vector<1x32xf32>, vector<1x32xf32>, vector<1x32xf32>, vector<1x32xf32>, vector<1x32xf32>, vector<1x32xf32>, vector<1x32xf32>, vector<1x32xf32>, vector<1x32xf32>, vector<1x32xf32>, vector<1x32xf32>, vector<1x32xf32> -> vector<1x512xf32>
    %143 = vector.shape_cast %142 : vector<1x512xf32> to vector<1x1x512xf32>
    %c0_41 = arith.constant 0 : index
    %c0_42 = arith.constant 0 : index
    %c0_43 = arith.constant 0 : index
    %144 = vector.load %arg6[%c0_41, %c0_42, %c0_43] : memref<1x1x512xf32, #tpu.memory_space<vmem>>, vector<1x1x512xf32>
    tpu.vector_store %arg6[%c0_41, %c0_42, %c0_43], %143 {strides = array<i32>} : memref<1x1x512xf32, #tpu.memory_space<vmem>>, vector<1x1x512xf32>,
    %145 = vector.shape_cast %125 : vector<2x8x8xf32> to vector<16x8xf32>
    %146 = vector.extract_strided_slice %145 {offsets = [0, 0], sizes = [1, 8], strides = [1, 1]} : vector<16x8xf32> to vector<1x8xf32>
    %147 = vector.extract_strided_slice %145 {offsets = [1, 0], sizes = [1, 8], strides = [1, 1]} : vector<16x8xf32> to vector<1x8xf32>
    %148 = vector.extract_strided_slice %145 {offsets = [2, 0], sizes = [1, 8], strides = [1, 1]} : vector<16x8xf32> to vector<1x8xf32>
    %149 = vector.extract_strided_slice %145 {offsets = [3, 0], sizes = [1, 8], strides = [1, 1]} : vector<16x8xf32> to vector<1x8xf32>
    %150 = vector.extract_strided_slice %145 {offsets = [4, 0], sizes = [1, 8], strides = [1, 1]} : vector<16x8xf32> to vector<1x8xf32>
    %151 = vector.extract_strided_slice %145 {offsets = [5, 0], sizes = [1, 8], strides = [1, 1]} : vector<16x8xf32> to vector<1x8xf32>
    %152 = vector.extract_strided_slice %145 {offsets = [6, 0], sizes = [1, 8], strides = [1, 1]} : vector<16x8xf32> to vector<1x8xf32>
    %153 = vector.extract_strided_slice %145 {offsets = [7, 0], sizes = [1, 8], strides = [1, 1]} : vector<16x8xf32> to vector<1x8xf32>
    %154 = vector.extract_strided_slice %145 {offsets = [8, 0], sizes = [1, 8], strides = [1, 1]} : vector<16x8xf32> to vector<1x8xf32>
    %155 = vector.extract_strided_slice %145 {offsets = [9, 0], sizes = [1, 8], strides = [1, 1]} : vector<16x8xf32> to vector<1x8xf32>
    %156 = vector.extract_strided_slice %145 {offsets = [10, 0], sizes = [1, 8], strides = [1, 1]} : vector<16x8xf32> to vector<1x8xf32>
    %157 = vector.extract_strided_slice %145 {offsets = [11, 0], sizes = [1, 8], strides = [1, 1]} : vector<16x8xf32> to vector<1x8xf32>
    %158 = vector.extract_strided_slice %145 {offsets = [12, 0], sizes = [1, 8], strides = [1, 1]} : vector<16x8xf32> to vector<1x8xf32>
    %159 = vector.extract_strided_slice %145 {offsets = [13, 0], sizes = [1, 8], strides = [1, 1]} : vector<16x8xf32> to vector<1x8xf32>
    %160 = vector.extract_strided_slice %145 {offsets = [14, 0], sizes = [1, 8], strides = [1, 1]} : vector<16x8xf32> to vector<1x8xf32>
    %161 = vector.extract_strided_slice %145 {offsets = [15, 0], sizes = [1, 8], strides = [1, 1]} : vector<16x8xf32> to vector<1x8xf32>
    %162 = tpu.concatenate %146, %147, %148, %149, %150, %151, %152, %153, %154, %155, %156, %157, %158, %159, %160, %161 in 1 : vector<1x8xf32>, vector<1x8xf32>, vector<1x8xf32>, vector<1x8xf32>, vector<1x8xf32>, vector<1x8xf32>, vector<1x8xf32>, vector<1x8xf32>, vector<1x8xf32>, vector<1x8xf32>, vector<1x8xf32>, vector<1x8xf32>, vector<1x8xf32>, vector<1x8xf32>, vector<1x8xf32>, vector<1x8xf32> -> vector<1x128xf32>
    %163 = vector.shape_cast %162 : vector<1x128xf32> to vector<1x1x128xf32>
    %c0_44 = arith.constant 0 : index
    %c0_45 = arith.constant 0 : index
    %c0_46 = arith.constant 0 : index
    %164 = vector.load %arg7[%c0_44, %c0_45, %c0_46] : memref<1x1x128xf32, #tpu.memory_space<vmem>>, vector<1x1x128xf32>
    tpu.vector_store %arg7[%c0_44, %c0_45, %c0_46], %163 {strides = array<i32>} : memref<1x1x128xf32, #tpu.memory_space<vmem>>, vector<1x1x128xf32>,
    return
  }
  func.func @transform_0(%arg0: i32) -> (i32, i32, i32) {
    %c0_i32 = arith.constant 0 : i32
    %c0_i32_0 = arith.constant 0 : i32
    %c0_i32_1 = arith.constant 0 : i32
    return %arg0, %c0_i32, %c0_i32_0 : i32, i32, i32
  }
  func.func @transform_1(%arg0: i32) -> (i32, i32, i32) {
    %c0_i32 = arith.constant 0 : i32
    %c0_i32_0 = arith.constant 0 : i32
    %c0_i32_1 = arith.constant 0 : i32
    return %arg0, %c0_i32, %c0_i32_0 : i32, i32, i32
  }
  func.func @transform_2(%arg0: i32) -> (i32, i32, i32) {
    %c0_i32 = arith.constant 0 : i32
    %c0_i32_0 = arith.constant 0 : i32
    %c0_i32_1 = arith.constant 0 : i32
    return %arg0, %c0_i32, %c0_i32_0 : i32, i32, i32
  }
  func.func @transform_3(%arg0: i32) -> (i32, i32) {
    %c0_i32 = arith.constant 0 : i32
    %c0_i32_0 = arith.constant 0 : i32
    %c0_i32_1 = arith.constant 0 : i32
    return %c0_i32, %c0_i32_0 : i32, i32
  }
  func.func @transform_4(%arg0: i32) -> (i32, i32) {
    %c0_i32 = arith.constant 0 : i32
    %c0_i32_0 = arith.constant 0 : i32
    %c0_i32_1 = arith.constant 0 : i32
    return %c0_i32, %c0_i32_0 : i32, i32
  }
  func.func @transform_5(%arg0: i32) -> (i32, i32, i32) {
    %c0_i32 = arith.constant 0 : i32
    %c0_i32_0 = arith.constant 0 : i32
    %c0_i32_1 = arith.constant 0 : i32
    return %arg0, %c0_i32, %c0_i32_0 : i32, i32, i32
  }
  func.func @transform_6(%arg0: i32) -> (i32, i32, i32) {
    %c0_i32 = arith.constant 0 : i32
    %c0_i32_0 = arith.constant 0 : i32
    %c0_i32_1 = arith.constant 0 : i32
    return %arg0, %c0_i32, %c0_i32_0 : i32, i32, i32
  }
}

</mosaic_0001>

<llo_original>
// kernel: tpu_custom_call.1
$region0: #{tpu_custom_call.1}
  #allocation0 [shape = 'u32[]', space=smem, size = 0x4, offset = 0x4, fixed_abs, tag = 'smem constant byte address 0x4 - core index']
  #allocation1 [shape = 'u32[144,128]{1,0:T(1,128)}', space=vmem, size = 0x12000, scoped, tag = 'internal scratch']
  %s0 = inlined_call_operand.hbm [shape: f32[2,8,32], index: 0, kind: input, shape index: {}]
  %s1 = inlined_call_operand.hbm [shape: f32[2,8,32], index: 1, kind: input, shape index: {}]
  %s2 = inlined_call_operand.hbm [shape: f32[2,8,32], index: 2, kind: input, shape index: {}]
  %s3 = inlined_call_operand.hbm [shape: bf16[32,128], index: 3, kind: input, shape index: {}]
  %s4 = inlined_call_operand.vmem [shape: f32[1,32], index: 4, kind: input, shape index: {}]
  %s5 = inlined_call_operand.hbm [shape: f32[1,1,512], index: 5, kind: output, shape index: {0}]
  %s6 = inlined_call_operand.hbm [shape: f32[1,1,128], index: 6, kind: output, shape index: {1}]
  %7 = xla_tuple %s5, %s6
  %s8 = sld [smem:[#allocation0]]
  $region54: #{tpu_custom_call.1} parent=0
    _
  %s10 = ssub.s32 1, %s8
  %s11 = scalar_select 0, %s10, %s8
  $region1: #{tpu_custom_call.1} parent=0
    #allocation2 [shape = 'u8[8192]{0}', space=vmem, size = 0x2000, scoped, tag = 'input window, operand 0, single buffered']
    #allocation3 [shape = 's32[1]{0}', space=sflag, size = 0x4, scoped, tag = 'scoped memory for tpu_custom_call.1']
    #allocation4 [shape = 's32[1]{0}', space=sflag, size = 0x4, scoped, tag = 'scoped memory for tpu_custom_call.1']
    #allocation5 [shape = 'u8[8192]{0}', space=vmem, size = 0x2000, scoped, tag = 'input window, operand 1, single buffered']
    #allocation6 [shape = 's32[1]{0}', space=sflag, size = 0x4, scoped, tag = 'scoped memory for tpu_custom_call.1']
    #allocation7 [shape = 'u8[8192]{0}', space=vmem, size = 0x2000, scoped, tag = 'input window, operand 2, single buffered']
    #allocation8 [shape = 'u8[8192]{0}', space=vmem, size = 0x2000, scoped, tag = 'input window, operand 3, single buffered']
    #allocation9 [shape = 's32[1]{0}', space=sflag, size = 0x4, scoped, tag = 'scoped memory for tpu_custom_call.1']
    #allocation10 [shape = 'u8[2048]{0}', space=vmem, size = 0x800, scoped, tag = 'output window, operand 0, single buffered']
    #allocation11 [shape = 'u8[512]{0}', space=vmem, size = 0x400, scoped, tag = 'output window, operand 1, single buffered']
    #allocation12 [shape = 's32[1]{0}', space=sflag, size = 0x4, scoped, tag = 'scoped memory for tpu_custom_call.1']
    %12 = vsyncpa [#allocation3], 0
    %13 = vsyncpa [#allocation6], 0
    %14 = vsyncpa [#allocation9], 0
    %15 = vsyncpa [#allocation4], 0
    %16 = vsyncpa [#allocation12], 0
    // Predicated region
    $region2: #{tpu_custom_call.1} parent=1 // pred_check
      _
    $region3: #{tpu_custom_call.1} parent=1 // pred_check_branch
      %18 = sbr.rel (0) target = $region5
    $region4: #{tpu_custom_call.1} parent=1 // pred_region
      %s20 = ssub.s32 256, 256
      %21 = vsyncadd [#allocation3], %s20
      %s22 = sshll.u32 [#allocation2], 4
      %s23 = int_to_ptr.vmem [resolvable:$true] %s22
      %28 = dma.hbm_to_vmem [thread:$0]  %s0, 256, %s23, [#allocation3], 128, 128, 8
    $region5: #{tpu_custom_call.1} parent=1 // pred_fallthru
      _
    // Predicated region
    $region6: #{tpu_custom_call.1} parent=1 // pred_check
      _
    $region7: #{tpu_custom_call.1} parent=1 // pred_check_branch
      %30 = sbr.rel (0) target = $region9
    $region8: #{tpu_custom_call.1} parent=1 // pred_region
      %s32 = ssub.s32 256, 256
      %33 = vsyncadd [#allocation6], %s32
      %s34 = sshll.u32 [#allocation5], 4
      %s35 = int_to_ptr.vmem [resolvable:$true] %s34
      %40 = dma.hbm_to_vmem [thread:$0]  %s1, 256, %s35, [#allocation6], 128, 128, 8
    $region9: #{tpu_custom_call.1} parent=1 // pred_fallthru
      _
    // Predicated region
    $region10: #{tpu_custom_call.1} parent=1 // pred_check
      _
    $region11: #{tpu_custom_call.1} parent=1 // pred_check_branch
      %42 = sbr.rel (0) target = $region13
    $region12: #{tpu_custom_call.1} parent=1 // pred_region
      %s44 = ssub.s32 256, 256
      %45 = vsyncadd [#allocation6], %s44
      %s46 = sshll.u32 [#allocation7], 4
      %s47 = int_to_ptr.vmem [resolvable:$true] %s46
      %52 = dma.hbm_to_vmem [thread:$0]  %s2, 256, %s47, [#allocation6], 128, 128, 8
    $region13: #{tpu_custom_call.1} parent=1 // pred_fallthru
      _
    // Predicated region
    $region14: #{tpu_custom_call.1} parent=1 // pred_check
      _
    $region15: #{tpu_custom_call.1} parent=1 // pred_check_branch
      %54 = sbr.rel (0) target = $region17
    $region16: #{tpu_custom_call.1} parent=1 // pred_region
      %s56 = ssub.s32 256, 256
      %57 = vsyncadd [#allocation9], %s56
      %s58 = sshll.u32 [#allocation8], 4
      %s59 = int_to_ptr.vmem [resolvable:$true] %s58
      %64 = dma.hbm_to_vmem [thread:$0]  %s3, 256, %s59, [#allocation9], 64, 64, 4
    $region17: #{tpu_custom_call.1} parent=1 // pred_fallthru
      _
    // Predicated region
    $region18: #{tpu_custom_call.1} parent=1 // pred_check
      _
    $region19: #{tpu_custom_call.1} parent=1 // pred_check_branch
      %66 = sbr.rel (0) target = $region21
    $region20: #{tpu_custom_call.1} parent=1 // pred_region
      _
    $region21: #{tpu_custom_call.1} parent=1 // pred_fallthru
      _
    // Predicated region
    $region22: #{tpu_custom_call.1} parent=1 // pred_check
      _
    $region23: #{tpu_custom_call.1} parent=1 // pred_check_branch
      %68 = sbr.rel (0) target = $region25
    $region24: #{tpu_custom_call.1} parent=1 // pred_region
      %69 = dma.done [#allocation3], 256
    $region25: #{tpu_custom_call.1} parent=1 // pred_fallthru
      _
    // Predicated region
    $region26: #{tpu_custom_call.1} parent=1 // pred_check
      _
    $region27: #{tpu_custom_call.1} parent=1 // pred_check_branch
      %71 = sbr.rel (0) target = $region29
    $region28: #{tpu_custom_call.1} parent=1 // pred_region
      %72 = dma.done [#allocation6], 256
    $region29: #{tpu_custom_call.1} parent=1 // pred_fallthru
      _
    // Predicated region
    $region30: #{tpu_custom_call.1} parent=1 // pred_check
      _
    $region31: #{tpu_custom_call.1} parent=1 // pred_check_branch
      %74 = sbr.rel (0) target = $region33
    $region32: #{tpu_custom_call.1} parent=1 // pred_region
      %75 = dma.done [#allocation6], 256
    $region33: #{tpu_custom_call.1} parent=1 // pred_fallthru
      _
    // Predicated region
    $region34: #{tpu_custom_call.1} parent=1 // pred_check
      _
    $region35: #{tpu_custom_call.1} parent=1 // pred_check_branch
      %77 = sbr.rel (0) target = $region37
    $region36: #{tpu_custom_call.1} parent=1 // pred_region
      %78 = dma.done [#allocation9], 256
    $region37: #{tpu_custom_call.1} parent=1 // pred_fallthru
      _
    %v80 = vld [vmem:[#allocation8] sm:$0xf]
    %v81 = vld [vmem:[#allocation8 + $0x4] sm:$0xf]
    %v82 = vld [vmem:[#allocation8 + $0x8] sm:$0xf]
    %v83 = vld [vmem:[#allocation8 + $0xc] sm:$0xf]
    %v84 = vld [vmem:[#allocation2] sm:$0xff]
    %v85 = vld [vmem:[#allocation2 + $0x8] sm:$0xff]
    %v86 = vpack.c.bf16 %v85, %v84
    %v87 = vld [vmem:[#allocation5] sm:$0xff]
    %v88 = vld [vmem:[#allocation5 + $0x8] sm:$0xff]
    %v89 = vpack.c.bf16 %v88, %v87
    %v90 = vld [vmem:[#allocation7] sm:$0xff]
    %v91 = vld [vmem:[#allocation7 + $0x8] sm:$0xff]
    %v92 = vpack.c.bf16 %v91, %v90
    %v97 = vunpack.c.l.b16 %v80
    %v98 = vunpack.c.l.b16 %v81
    %v99 = vunpack.c.l.b16 %v82
    %v100 = vunpack.c.l.b16 %v83
    %v101 = vpack.c.b16 %v98, %v97
    %v102 = vpack.c.b16 %v100, %v99
    %vm105 = vcmask 261120
    %v107 = vsel %vm105, %v86, 0
    %109 = vmatprep.subr.bf16.mxu0 0
    %110 = vmatpush1.bf16.msra.mxu0 %v101
    %111 = vmatprep.subr.bf16.mxu0 0
    %112 = vmatpush1.bf16.msra.mxu0 %v102
    %113 = vmatprep.subr.bf16.mxu0 0
    %114 = vmatpush1.bf16.msra.mxu0 0
    %115 = vmatprep.subr.bf16.mxu0 0
    %116 = vmatpush1.bf16.msra.mxu0 0
    %117 = vmatprep.subr.bf16.mxu0 0
    %118 = vmatpush1.bf16.msra.mxu0 0
    %119 = vmatprep.subr.bf16.mxu0 0
    %120 = vmatpush1.bf16.msra.mxu0 0
    %121 = vmatprep.subr.bf16.mxu0 0
    %122 = vmatpush1.bf16.msra.mxu0 0
    %123 = vmatprep.subr.bf16.mxu0 0
    %124 = vmatpush1.bf16.msra.mxu0 0
    %125 = vmatprep.subr.bf16.mxu0 0
    %126 = vmatpush1.bf16.msra.mxu0 0
    %127 = vmatprep.subr.bf16.mxu0 0
    %128 = vmatpush1.bf16.msra.mxu0 0
    %129 = vmatprep.subr.bf16.mxu0 0
    %130 = vmatpush1.bf16.msra.mxu0 0
    %131 = vmatprep.subr.bf16.mxu0 0
    %132 = vmatpush1.bf16.msra.mxu0 0
    %133 = vmatprep.subr.bf16.mxu0 0
    %134 = vmatpush1.bf16.msra.mxu0 0
    %135 = vmatprep.subr.bf16.mxu0 0
    %136 = vmatpush1.bf16.msra.mxu0 0
    %137 = vmatprep.subr.bf16.mxu0 0
    %138 = vmatpush1.bf16.msra.mxu0 0
    %139 = vmatprep.subr.bf16.mxu0 0
    %140 = vmatpush1.bf16.msra.mxu0 0
    %141 = vmatprep.mubr.bf16.mxu0 0
    %142 = vmatmul.mubr.bf16.gmra.mrb[0].mxu0 %v107
    %v143 = vpop.f32.mrb[0].mxu0
    %v144 = vadd.f32 0.0, %v143
    %v145 = vpop.f32.mrb[0].mxu0
    %v146 = vpop.f32.mrb[0].mxu0
    %v147 = vadd.f32 0.0, %v146
    %v148 = vpop.f32.mrb[0].mxu0
    %149 = vdwg.mxu0
    %150 = vrot.lane.b32.xlu0 %v101, 96
    %v151 = vpop.permute.xlu0 %150
    %152 = vrot.lane.b32.xlu0 %v102, 96
    %v153 = vpop.permute.xlu0 %152
    %v157 = vsel %vm105, %v89, 0
    %159 = vmatprep.subr.bf16.mxu0 0
    %160 = vmatpush1.bf16.msra.mxu0 %v151
    %161 = vmatprep.subr.bf16.mxu0 0
    %162 = vmatpush1.bf16.msra.mxu0 %v153
    %163 = vmatprep.subr.bf16.mxu0 0
    %164 = vmatpush1.bf16.msra.mxu0 0
    %165 = vmatprep.subr.bf16.mxu0 0
    %166 = vmatpush1.bf16.msra.mxu0 0
    %167 = vmatprep.subr.bf16.mxu0 0
    %168 = vmatpush1.bf16.msra.mxu0 0
    %169 = vmatprep.subr.bf16.mxu0 0
    %170 = vmatpush1.bf16.msra.mxu0 0
    %171 = vmatprep.subr.bf16.mxu0 0
    %172 = vmatpush1.bf16.msra.mxu0 0
    %173 = vmatprep.subr.bf16.mxu0 0
    %174 = vmatpush1.bf16.msra.mxu0 0
    %175 = vmatprep.subr.bf16.mxu0 0
    %176 = vmatpush1.bf16.msra.mxu0 0
    %177 = vmatprep.subr.bf16.mxu0 0
    %178 = vmatpush1.bf16.msra.mxu0 0
    %179 = vmatprep.subr.bf16.mxu0 0
    %180 = vmatpush1.bf16.msra.mxu0 0
    %181 = vmatprep.subr.bf16.mxu0 0
    %182 = vmatpush1.bf16.msra.mxu0 0
    %183 = vmatprep.subr.bf16.mxu0 0
    %184 = vmatpush1.bf16.msra.mxu0 0
    %185 = vmatprep.subr.bf16.mxu0 0
    %186 = vmatpush1.bf16.msra.mxu0 0
    %187 = vmatprep.subr.bf16.mxu0 0
    %188 = vmatpush1.bf16.msra.mxu0 0
    %189 = vmatprep.subr.bf16.mxu0 0
    %190 = vmatpush1.bf16.msra.mxu0 0
    %191 = vmatprep.mubr.bf16.mxu0 0
    %192 = vmatmul.mubr.bf16.gmra.mrb[0].mxu0 %v157
    %v193 = vpop.f32.mrb[0].mxu0
    %v194 = vadd.f32 0.0, %v193
    %v195 = vpop.f32.mrb[0].mxu0
    %v196 = vpop.f32.mrb[0].mxu0
    %v197 = vadd.f32 0.0, %v196
    %v198 = vpop.f32.mrb[0].mxu0
    %199 = vdwg.mxu0
    %200 = vrot.lane.b32.xlu0 %v101, 64
    %v201 = vpop.permute.xlu0 %200
    %202 = vrot.lane.b32.xlu0 %v102, 64
    %v203 = vpop.permute.xlu0 %202
    %v207 = vsel %vm105, %v92, 0
    %209 = vmatprep.subr.bf16.mxu0 0
    %210 = vmatpush1.bf16.msra.mxu0 %v201
    %211 = vmatprep.subr.bf16.mxu0 0
    %212 = vmatpush1.bf16.msra.mxu0 %v203
    %213 = vmatprep.subr.bf16.mxu0 0
    %214 = vmatpush1.bf16.msra.mxu0 0
    %215 = vmatprep.subr.bf16.mxu0 0
    %216 = vmatpush1.bf16.msra.mxu0 0
    %217 = vmatprep.subr.bf16.mxu0 0
    %218 = vmatpush1.bf16.msra.mxu0 0
    %219 = vmatprep.subr.bf16.mxu0 0
    %220 = vmatpush1.bf16.msra.mxu0 0
    %221 = vmatprep.subr.bf16.mxu0 0
    %222 = vmatpush1.bf16.msra.mxu0 0
    %223 = vmatprep.subr.bf16.mxu0 0
    %224 = vmatpush1.bf16.msra.mxu0 0
    %225 = vmatprep.subr.bf16.mxu0 0
    %226 = vmatpush1.bf16.msra.mxu0 0
    %227 = vmatprep.subr.bf16.mxu0 0
    %228 = vmatpush1.bf16.msra.mxu0 0
    %229 = vmatprep.subr.bf16.mxu0 0
    %230 = vmatpush1.bf16.msra.mxu0 0
    %231 = vmatprep.subr.bf16.mxu0 0
    %232 = vmatpush1.bf16.msra.mxu0 0
    %233 = vmatprep.subr.bf16.mxu0 0
    %234 = vmatpush1.bf16.msra.mxu0 0
    %235 = vmatprep.subr.bf16.mxu0 0
    %236 = vmatpush1.bf16.msra.mxu0 0
    %237 = vmatprep.subr.bf16.mxu0 0
    %238 = vmatpush1.bf16.msra.mxu0 0
    %239 = vmatprep.subr.bf16.mxu0 0
    %240 = vmatpush1.bf16.msra.mxu0 0
    %241 = vmatprep.mubr.bf16.mxu0 0
    %242 = vmatmul.mubr.bf16.gmra.mrb[0].mxu0 %v207
    %v243 = vpop.f32.mrb[0].mxu0
    %v244 = vadd.f32 0.0, %v243
    %v245 = vpop.f32.mrb[0].mxu0
    %v246 = vpop.f32.mrb[0].mxu0
    %v247 = vadd.f32 0.0, %v246
    %v248 = vpop.f32.mrb[0].mxu0
    %249 = vdwg.mxu0
    %v250 = vpack.c.bf16 %v144, %v144
    %v251 = vpack.c.bf16 %v147, %v147
    %v252 = vpack.c.bf16 %v194, %v194
    %v253 = vpack.c.bf16 %v197, %v197
    %v254 = vpack.c.bf16 %v244, %v244
    %v255 = vpack.c.bf16 %v247, %v247
    %vm256 = vcmask 64512
    %v258 = vsel %vm256, %v250, 0
    %v261 = vsel %vm256, %v252, 0
    %263 = vmatprep.subr.bf16.mxu0 0
    %264 = vmatpush1.bf16.xpose.msra.mxu0 %v261
    %265 = vmatprep.subr.bf16.mxu0 0
    %266 = vmatpush1.bf16.xpose.msra.mxu0 0
    %267 = vmatprep.subr.bf16.mxu0 0
    %268 = vmatpush1.bf16.xpose.msra.mxu0 0
    %269 = vmatprep.subr.bf16.mxu0 0
    %270 = vmatpush1.bf16.xpose.msra.mxu0 0
    %271 = vmatprep.subr.bf16.mxu0 0
    %272 = vmatpush1.bf16.xpose.msra.mxu0 0
    %273 = vmatprep.subr.bf16.mxu0 0
    %274 = vmatpush1.bf16.xpose.msra.mxu0 0
    %275 = vmatprep.subr.bf16.mxu0 0
    %276 = vmatpush1.bf16.xpose.msra.mxu0 0
    %277 = vmatprep.subr.bf16.mxu0 0
    %278 = vmatpush1.bf16.xpose.msra.mxu0 0
    %279 = vmatprep.subr.bf16.mxu0 0
    %280 = vmatpush1.bf16.xpose.msra.mxu0 0
    %281 = vmatprep.subr.bf16.mxu0 0
    %282 = vmatpush1.bf16.xpose.msra.mxu0 0
    %283 = vmatprep.subr.bf16.mxu0 0
    %284 = vmatpush1.bf16.xpose.msra.mxu0 0
    %285 = vmatprep.subr.bf16.mxu0 0
    %286 = vmatpush1.bf16.xpose.msra.mxu0 0
    %287 = vmatprep.subr.bf16.mxu0 0
    %288 = vmatpush1.bf16.xpose.msra.mxu0 0
    %289 = vmatprep.subr.bf16.mxu0 0
    %290 = vmatpush1.bf16.xpose.msra.mxu0 0
    %291 = vmatprep.subr.bf16.mxu0 0
    %292 = vmatpush1.bf16.xpose.msra.mxu0 0
    %293 = vmatprep.subr.bf16.mxu0 0
    %294 = vmatpush1.bf16.xpose.msra.mxu0 0
    %295 = vmatprep.mubr.bf16.mxu0 0
    %296 = vmatmul.mubr.bf16.gmra.mrb[0].mxu0 %v258
    %v297 = vpop.f32.mrb[0].mxu0
    %v298 = vadd.f32 0.0, %v297
    %v299 = vpop.f32.mrb[0].mxu0
    %v300 = vpop.f32.mrb[0].mxu0
    %v301 = vpop.f32.mrb[0].mxu0
    %302 = vdwg.mxu0
    %v304 = vsel %vm256, %v251, 0
    %v307 = vsel %vm256, %v253, 0
    %309 = vmatprep.subr.bf16.mxu0 0
    %310 = vmatpush1.bf16.xpose.msra.mxu0 %v307
    %311 = vmatprep.subr.bf16.mxu0 0
    %312 = vmatpush1.bf16.xpose.msra.mxu0 0
    %313 = vmatprep.subr.bf16.mxu0 0
    %314 = vmatpush1.bf16.xpose.msra.mxu0 0
    %315 = vmatprep.subr.bf16.mxu0 0
    %316 = vmatpush1.bf16.xpose.msra.mxu0 0
    %317 = vmatprep.subr.bf16.mxu0 0
    %318 = vmatpush1.bf16.xpose.msra.mxu0 0
    %319 = vmatprep.subr.bf16.mxu0 0
    %320 = vmatpush1.bf16.xpose.msra.mxu0 0
    %321 = vmatprep.subr.bf16.mxu0 0
    %322 = vmatpush1.bf16.xpose.msra.mxu0 0
    %323 = vmatprep.subr.bf16.mxu0 0
    %324 = vmatpush1.bf16.xpose.msra.mxu0 0
    %325 = vmatprep.subr.bf16.mxu0 0
    %326 = vmatpush1.bf16.xpose.msra.mxu0 0
    %327 = vmatprep.subr.bf16.mxu0 0
    %328 = vmatpush1.bf16.xpose.msra.mxu0 0
    %329 = vmatprep.subr.bf16.mxu0 0
    %330 = vmatpush1.bf16.xpose.msra.mxu0 0
    %331 = vmatprep.subr.bf16.mxu0 0
    %332 = vmatpush1.bf16.xpose.msra.mxu0 0
    %333 = vmatprep.subr.bf16.mxu0 0
    %334 = vmatpush1.bf16.xpose.msra.mxu0 0
    %335 = vmatprep.subr.bf16.mxu0 0
    %336 = vmatpush1.bf16.xpose.msra.mxu0 0
    %337 = vmatprep.subr.bf16.mxu0 0
    %338 = vmatpush1.bf16.xpose.msra.mxu0 0
    %339 = vmatprep.subr.bf16.mxu0 0
    %340 = vmatpush1.bf16.xpose.msra.mxu0 0
    %341 = vmatprep.mubr.bf16.mxu0 0
    %342 = vmatmul.mubr.bf16.gmra.mrb[0].mxu0 %v304
    %v343 = vpop.f32.mrb[0].mxu0
    %v344 = vadd.f32 0.0, %v343
    %v345 = vpop.f32.mrb[0].mxu0
    %v346 = vpop.f32.mrb[0].mxu0
    %v347 = vpop.f32.mrb[0].mxu0
    %348 = vdwg.mxu0
    %v349 = vmul.f32 %v298, 3.0517578e-05
    %v350 = vmul.f32 %v344, 3.0517578e-05
    %v351 = vadd.f32 %v349, 0.0
    %v352 = vadd.f32 %v350, 0.0
    %v353 = vsel %vm256, %v349, -inf
    %354 = vmax.xlane.f32.xlu0 %v353
    %v355 = vpop.xlane.xlu0 %354
    %v356 = vsel %vm256, %v350, -inf
    %357 = vmax.xlane.f32.xlu0 %v356
    %v358 = vpop.xlane.xlu0 %357
    %v359 = vsub.f32 %v349, %v355
    %v360 = vsub.f32 %v350, %v358
    %v361 = vmul.f32 %v359, 1.442695
    %v362 = vpow.pop %v361
    %v363 = vmul.f32 %v360, 1.442695
    %v364 = vpow.pop %v363
    %v365 = vsel %vm256, %v362, 0.0
    %366 = vadd.xlane.f32.xlu0 %v365
    %v367 = vpop.xlane.xlu0 %366
    %v368 = vsel %vm256, %v364, 0.0
    %369 = vadd.xlane.f32.xlu0 %v368
    %v370 = vpop.xlane.xlu0 %369
    %v371 = vrcp.pop %v367
    %v372 = vrcp.pop %v370
    %v373 = vmul.f32 %v362, %v371
    %v374 = vmul.f32 %v364, %v372
    %v375 = vpack.c.bf16 %v373, %v373
    %v376 = vpack.c.bf16 %v374, %v374
    %v378 = vsel %vm256, %v375, 0
    %vm380 = vcmask 1043456
    %v382 = vsel %vm380, %v254, 0
    %384 = vmatprep.subr.bf16.mxu0 0
    %385 = vmatpush1.bf16.msra.mxu0 %v382
    %386 = vmatprep.subr.bf16.mxu0 0
    %387 = vmatpush1.bf16.msra.mxu0 0
    %388 = vmatprep.subr.bf16.mxu0 0
    %389 = vmatpush1.bf16.msra.mxu0 0
    %390 = vmatprep.subr.bf16.mxu0 0
    %391 = vmatpush1.bf16.msra.mxu0 0
    %392 = vmatprep.subr.bf16.mxu0 0
    %393 = vmatpush1.bf16.msra.mxu0 0
    %394 = vmatprep.subr.bf16.mxu0 0
    %395 = vmatpush1.bf16.msra.mxu0 0
    %396 = vmatprep.subr.bf16.mxu0 0
    %397 = vmatpush1.bf16.msra.mxu0 0
    %398 = vmatprep.subr.bf16.mxu0 0
    %399 = vmatpush1.bf16.msra.mxu0 0
    %400 = vmatprep.subr.bf16.mxu0 0
    %401 = vmatpush1.bf16.msra.mxu0 0
    %402 = vmatprep.subr.bf16.mxu0 0
    %403 = vmatpush1.bf16.msra.mxu0 0
    %404 = vmatprep.subr.bf16.mxu0 0
    %405 = vmatpush1.bf16.msra.mxu0 0
    %406 = vmatprep.subr.bf16.mxu0 0
    %407 = vmatpush1.bf16.msra.mxu0 0
    %408 = vmatprep.subr.bf16.mxu0 0
    %409 = vmatpush1.bf16.msra.mxu0 0
    %410 = vmatprep.subr.bf16.mxu0 0
    %411 = vmatpush1.bf16.msra.mxu0 0
    %412 = vmatprep.subr.bf16.mxu0 0
    %413 = vmatpush1.bf16.msra.mxu0 0
    %414 = vmatprep.subr.bf16.mxu0 0
    %415 = vmatpush1.bf16.msra.mxu0 0
    %416 = vmatprep.mubr.bf16.mxu0 0
    %417 = vmatmul.mubr.bf16.gmra.mrb[0].mxu0 %v378
    %v418 = vpop.f32.mrb[0].mxu0
    %v419 = vadd.f32 0.0, %v418
    %v420 = vpop.f32.mrb[0].mxu0
    %v421 = vpop.f32.mrb[0].mxu0
    %v422 = vpop.f32.mrb[0].mxu0
    %423 = vdwg.mxu0
    %v425 = vsel %vm256, %v376, 0
    %v428 = vsel %vm380, %v255, 0
    %430 = vmatprep.subr.bf16.mxu0 0
    %431 = vmatpush1.bf16.msra.mxu0 %v428
    %432 = vmatprep.subr.bf16.mxu0 0
    %433 = vmatpush1.bf16.msra.mxu0 0
    %434 = vmatprep.subr.bf16.mxu0 0
    %435 = vmatpush1.bf16.msra.mxu0 0
    %436 = vmatprep.subr.bf16.mxu0 0
    %437 = vmatpush1.bf16.msra.mxu0 0
    %438 = vmatprep.subr.bf16.mxu0 0
    %439 = vmatpush1.bf16.msra.mxu0 0
    %440 = vmatprep.subr.bf16.mxu0 0
    %441 = vmatpush1.bf16.msra.mxu0 0
    %442 = vmatprep.subr.bf16.mxu0 0
    %443 = vmatpush1.bf16.msra.mxu0 0
    %444 = vmatprep.subr.bf16.mxu0 0
    %445 = vmatpush1.bf16.msra.mxu0 0
    %446 = vmatprep.subr.bf16.mxu0 0
    %447 = vmatpush1.bf16.msra.mxu0 0
    %448 = vmatprep.subr.bf16.mxu0 0
    %449 = vmatpush1.bf16.msra.mxu0 0
    %450 = vmatprep.subr.bf16.mxu0 0
    %451 = vmatpush1.bf16.msra.mxu0 0
    %452 = vmatprep.subr.bf16.mxu0 0
    %453 = vmatpush1.bf16.msra.mxu0 0
    %454 = vmatprep.subr.bf16.mxu0 0
    %455 = vmatpush1.bf16.msra.mxu0 0
    %456 = vmatprep.subr.bf16.mxu0 0
    %457 = vmatpush1.bf16.msra.mxu0 0
    %458 = vmatprep.subr.bf16.mxu0 0
    %459 = vmatpush1.bf16.msra.mxu0 0
    %460 = vmatprep.subr.bf16.mxu0 0
    %461 = vmatpush1.bf16.msra.mxu0 0
    %462 = vmatprep.mubr.bf16.mxu0 0
    %463 = vmatmul.mubr.bf16.gmra.mrb[0].mxu0 %v425
    %v464 = vpop.f32.mrb[0].mxu0
    %v465 = vadd.f32 0.0, %v464
    %v466 = vpop.f32.mrb[0].mxu0
    %v467 = vpop.f32.mrb[0].mxu0
    %v468 = vpop.f32.mrb[0].mxu0
    %469 = vdwg.mxu0
    %v470 = vpack.c.bf16 %v465, %v419
    %472 = vrot.lane.b32.xlu0 %v250, 120
    %v473 = vpop.permute.xlu0 %472
    %475 = vrot.lane.b32.xlu0 %v252, 120
    %v476 = vpop.permute.xlu0 %475
    %v478 = vsel %vm256, %v473, 0
    %v481 = vsel %vm256, %v476, 0
    %483 = vmatprep.subr.bf16.mxu0 0
    %484 = vmatpush1.bf16.xpose.msra.mxu0 %v481
    %485 = vmatprep.subr.bf16.mxu0 0
    %486 = vmatpush1.bf16.xpose.msra.mxu0 0
    %487 = vmatprep.subr.bf16.mxu0 0
    %488 = vmatpush1.bf16.xpose.msra.mxu0 0
    %489 = vmatprep.subr.bf16.mxu0 0
    %490 = vmatpush1.bf16.xpose.msra.mxu0 0
    %491 = vmatprep.subr.bf16.mxu0 0
    %492 = vmatpush1.bf16.xpose.msra.mxu0 0
    %493 = vmatprep.subr.bf16.mxu0 0
    %494 = vmatpush1.bf16.xpose.msra.mxu0 0
    %495 = vmatprep.subr.bf16.mxu0 0
    %496 = vmatpush1.bf16.xpose.msra.mxu0 0
    %497 = vmatprep.subr.bf16.mxu0 0
    %498 = vmatpush1.bf16.xpose.msra.mxu0 0
    %499 = vmatprep.subr.bf16.mxu0 0
    %500 = vmatpush1.bf16.xpose.msra.mxu0 0
    %501 = vmatprep.subr.bf16.mxu0 0
    %502 = vmatpush1.bf16.xpose.msra.mxu0 0
    %503 = vmatprep.subr.bf16.mxu0 0
    %504 = vmatpush1.bf16.xpose.msra.mxu0 0
    %505 = vmatprep.subr.bf16.mxu0 0
    %506 = vmatpush1.bf16.xpose.msra.mxu0 0
    %507 = vmatprep.subr.bf16.mxu0 0
    %508 = vmatpush1.bf16.xpose.msra.mxu0 0
    %509 = vmatprep.subr.bf16.mxu0 0
    %510 = vmatpush1.bf16.xpose.msra.mxu0 0
    %511 = vmatprep.subr.bf16.mxu0 0
    %512 = vmatpush1.bf16.xpose.msra.mxu0 0
    %513 = vmatprep.subr.bf16.mxu0 0
    %514 = vmatpush1.bf16.xpose.msra.mxu0 0
    %515 = vmatprep.mubr.bf16.mxu0 0
    %516 = vmatmul.mubr.bf16.gmra.mrb[0].mxu0 %v478
    %v517 = vpop.f32.mrb[0].mxu0
    %v518 = vadd.f32 0.0, %v517
    %v519 = vpop.f32.mrb[0].mxu0
    %v520 = vpop.f32.mrb[0].mxu0
    %v521 = vpop.f32.mrb[0].mxu0
    %522 = vdwg.mxu0
    %524 = vrot.lane.b32.xlu0 %v251, 120
    %v525 = vpop.permute.xlu0 %524
    %527 = vrot.lane.b32.xlu0 %v253, 120
    %v528 = vpop.permute.xlu0 %527
    %v530 = vsel %vm256, %v525, 0
    %v533 = vsel %vm256, %v528, 0
    %535 = vmatprep.subr.bf16.mxu0 0
    %536 = vmatpush1.bf16.xpose.msra.mxu0 %v533
    %537 = vmatprep.subr.bf16.mxu0 0
    %538 = vmatpush1.bf16.xpose.msra.mxu0 0
    %539 = vmatprep.subr.bf16.mxu0 0
    %540 = vmatpush1.bf16.xpose.msra.mxu0 0
    %541 = vmatprep.subr.bf16.mxu0 0
    %542 = vmatpush1.bf16.xpose.msra.mxu0 0
    %543 = vmatprep.subr.bf16.mxu0 0
    %544 = vmatpush1.bf16.xpose.msra.mxu0 0
    %545 = vmatprep.subr.bf16.mxu0 0
    %546 = vmatpush1.bf16.xpose.msra.mxu0 0
    %547 = vmatprep.subr.bf16.mxu0 0
    %548 = vmatpush1.bf16.xpose.msra.mxu0 0
    %549 = vmatprep.subr.bf16.mxu0 0
    %550 = vmatpush1.bf16.xpose.msra.mxu0 0
    %551 = vmatprep.subr.bf16.mxu0 0
    %552 = vmatpush1.bf16.xpose.msra.mxu0 0
    %553 = vmatprep.subr.bf16.mxu0 0
    %554 = vmatpush1.bf16.xpose.msra.mxu0 0
    %555 = vmatprep.subr.bf16.mxu0 0
    %556 = vmatpush1.bf16.xpose.msra.mxu0 0
    %557 = vmatprep.subr.bf16.mxu0 0
    %558 = vmatpush1.bf16.xpose.msra.mxu0 0
    %559 = vmatprep.subr.bf16.mxu0 0
    %560 = vmatpush1.bf16.xpose.msra.mxu0 0
    %561 = vmatprep.subr.bf16.mxu0 0
    %562 = vmatpush1.bf16.xpose.msra.mxu0 0
    %563 = vmatprep.subr.bf16.mxu0 0
    %564 = vmatpush1.bf16.xpose.msra.mxu0 0
    %565 = vmatprep.subr.bf16.mxu0 0
    %566 = vmatpush1.bf16.xpose.msra.mxu0 0
    %567 = vmatprep.mubr.bf16.mxu0 0
    %568 = vmatmul.mubr.bf16.gmra.mrb[0].mxu0 %v530
    %v569 = vpop.f32.mrb[0].mxu0
    %v570 = vadd.f32 0.0, %v569
    %v571 = vpop.f32.mrb[0].mxu0
    %v572 = vpop.f32.mrb[0].mxu0
    %v573 = vpop.f32.mrb[0].mxu0
    %574 = vdwg.mxu0
    %v575 = vmul.f32 %v518, 3.0517578e-05
    %v576 = vmul.f32 %v570, 3.0517578e-05
    %v577 = vadd.f32 %v351, %v575
    %v578 = vadd.f32 %v352, %v576
    %v579 = vsel %vm256, %v575, -inf
    %580 = vmax.xlane.f32.xlu0 %v579
    %v581 = vpop.xlane.xlu0 %580
    %v582 = vsel %vm256, %v576, -inf
    %583 = vmax.xlane.f32.xlu0 %v582
    %v584 = vpop.xlane.xlu0 %583
    %v585 = vsub.f32 %v575, %v581
    %v586 = vsub.f32 %v576, %v584
    %v587 = vmul.f32 %v585, 1.442695
    %v588 = vpow.pop %v587
    %v589 = vmul.f32 %v586, 1.442695
    %v590 = vpow.pop %v589
    %v591 = vsel %vm256, %v588, 0.0
    %592 = vadd.xlane.f32.xlu0 %v591
    %v593 = vpop.xlane.xlu0 %592
    %v594 = vsel %vm256, %v590, 0.0
    %595 = vadd.xlane.f32.xlu0 %v594
    %v596 = vpop.xlane.xlu0 %595
    %v597 = vrcp.pop %v593
    %v598 = vrcp.pop %v596
    %v599 = vmul.f32 %v588, %v597
    %v600 = vmul.f32 %v590, %v598
    %v601 = vpack.c.bf16 %v599, %v599
    %v602 = vpack.c.bf16 %v600, %v600
    %604 = vrot.lane.b32.xlu0 %v254, 120
    %v605 = vpop.permute.xlu0 %604
    %v607 = vsel %vm256, %v601, 0
    %v610 = vsel %vm380, %v605, 0
    %612 = vmatprep.subr.bf16.mxu0 0
    %613 = vmatpush1.bf16.msra.mxu0 %v610
    %614 = vmatprep.subr.bf16.mxu0 0
    %615 = vmatpush1.bf16.msra.mxu0 0
    %616 = vmatprep.subr.bf16.mxu0 0
    %617 = vmatpush1.bf16.msra.mxu0 0
    %618 = vmatprep.subr.bf16.mxu0 0
    %619 = vmatpush1.bf16.msra.mxu0 0
    %620 = vmatprep.subr.bf16.mxu0 0
    %621 = vmatpush1.bf16.msra.mxu0 0
    %622 = vmatprep.subr.bf16.mxu0 0
    %623 = vmatpush1.bf16.msra.mxu0 0
    %624 = vmatprep.subr.bf16.mxu0 0
    %625 = vmatpush1.bf16.msra.mxu0 0
    %626 = vmatprep.subr.bf16.mxu0 0
    %627 = vmatpush1.bf16.msra.mxu0 0
    %628 = vmatprep.subr.bf16.mxu0 0
    %629 = vmatpush1.bf16.msra.mxu0 0
    %630 = vmatprep.subr.bf16.mxu0 0
    %631 = vmatpush1.bf16.msra.mxu0 0
    %632 = vmatprep.subr.bf16.mxu0 0
    %633 = vmatpush1.bf16.msra.mxu0 0
    %634 = vmatprep.subr.bf16.mxu0 0
    %635 = vmatpush1.bf16.msra.mxu0 0
    %636 = vmatprep.subr.bf16.mxu0 0
    %637 = vmatpush1.bf16.msra.mxu0 0
    %638 = vmatprep.subr.bf16.mxu0 0
    %639 = vmatpush1.bf16.msra.mxu0 0
    %640 = vmatprep.subr.bf16.mxu0 0
    %641 = vmatpush1.bf16.msra.mxu0 0
    %642 = vmatprep.subr.bf16.mxu0 0
    %643 = vmatpush1.bf16.msra.mxu0 0
    %644 = vmatprep.mubr.bf16.mxu0 0
    %645 = vmatmul.mubr.bf16.gmra.mrb[0].mxu0 %v607
    %v646 = vpop.f32.mrb[0].mxu0
    %v647 = vadd.f32 0.0, %v646
    %v648 = vpop.f32.mrb[0].mxu0
    %v649 = vpop.f32.mrb[0].mxu0
    %v650 = vpop.f32.mrb[0].mxu0
    %651 = vdwg.mxu0
    %653 = vrot.lane.b32.xlu0 %v255, 120
    %v654 = vpop.permute.xlu0 %653
    %v656 = vsel %vm256, %v602, 0
    %v659 = vsel %vm380, %v654, 0
    %661 = vmatprep.subr.bf16.mxu0 0
    %662 = vmatpush1.bf16.msra.mxu0 %v659
    %663 = vmatprep.subr.bf16.mxu0 0
    %664 = vmatpush1.bf16.msra.mxu0 0
    %665 = vmatprep.subr.bf16.mxu0 0
    %666 = vmatpush1.bf16.msra.mxu0 0
    %667 = vmatprep.subr.bf16.mxu0 0
    %668 = vmatpush1.bf16.msra.mxu0 0
    %669 = vmatprep.subr.bf16.mxu0 0
    %670 = vmatpush1.bf16.msra.mxu0 0
    %671 = vmatprep.subr.bf16.mxu0 0
    %672 = vmatpush1.bf16.msra.mxu0 0
    %673 = vmatprep.subr.bf16.mxu0 0
    %674 = vmatpush1.bf16.msra.mxu0 0
    %675 = vmatprep.subr.bf16.mxu0 0
    %676 = vmatpush1.bf16.msra.mxu0 0
    %677 = vmatprep.subr.bf16.mxu0 0
    %678 = vmatpush1.bf16.msra.mxu0 0
    %679 = vmatprep.subr.bf16.mxu0 0
    %680 = vmatpush1.bf16.msra.mxu0 0
    %681 = vmatprep.subr.bf16.mxu0 0
    %682 = vmatpush1.bf16.msra.mxu0 0
    %683 = vmatprep.subr.bf16.mxu0 0
    %684 = vmatpush1.bf16.msra.mxu0 0
    %685 = vmatprep.subr.bf16.mxu0 0
    %686 = vmatpush1.bf16.msra.mxu0 0
    %687 = vmatprep.subr.bf16.mxu0 0
    %688 = vmatpush1.bf16.msra.mxu0 0
    %689 = vmatprep.subr.bf16.mxu0 0
    %690 = vmatpush1.bf16.msra.mxu0 0
    %691 = vmatprep.subr.bf16.mxu0 0
    %692 = vmatpush1.bf16.msra.mxu0 0
    %693 = vmatprep.mubr.bf16.mxu0 0
    %694 = vmatmul.mubr.bf16.gmra.mrb[0].mxu0 %v656
    %v695 = vpop.f32.mrb[0].mxu0
    %v696 = vadd.f32 0.0, %v695
    %v697 = vpop.f32.mrb[0].mxu0
    %v698 = vpop.f32.mrb[0].mxu0
    %v699 = vpop.f32.mrb[0].mxu0
    %700 = vdwg.mxu0
    %v701 = vpack.c.bf16 %v696, %v647
    %v702 = vpack.c.b16 %v98, %v98
    %703 = vrot.lane.b32.xlu0 %v702, 32
    %v704 = vpop.permute.xlu0 %703
    %v706 = vsel %vm256, %v701, 0
    %v709 = vsel %vm380, %v704, 0
    %711 = vmatprep.subr.bf16.mxu0 0
    %712 = vmatpush1.bf16.msra.mxu0 %v709
    %713 = vmatprep.subr.bf16.mxu0 0
    %714 = vmatpush1.bf16.msra.mxu0 0
    %715 = vmatprep.subr.bf16.mxu0 0
    %716 = vmatpush1.bf16.msra.mxu0 0
    %717 = vmatprep.subr.bf16.mxu0 0
    %718 = vmatpush1.bf16.msra.mxu0 0
    %719 = vmatprep.subr.bf16.mxu0 0
    %720 = vmatpush1.bf16.msra.mxu0 0
    %721 = vmatprep.subr.bf16.mxu0 0
    %722 = vmatpush1.bf16.msra.mxu0 0
    %723 = vmatprep.subr.bf16.mxu0 0
    %724 = vmatpush1.bf16.msra.mxu0 0
    %725 = vmatprep.subr.bf16.mxu0 0
    %726 = vmatpush1.bf16.msra.mxu0 0
    %727 = vmatprep.subr.bf16.mxu0 0
    %728 = vmatpush1.bf16.msra.mxu0 0
    %729 = vmatprep.subr.bf16.mxu0 0
    %730 = vmatpush1.bf16.msra.mxu0 0
    %731 = vmatprep.subr.bf16.mxu0 0
    %732 = vmatpush1.bf16.msra.mxu0 0
    %733 = vmatprep.subr.bf16.mxu0 0
    %734 = vmatpush1.bf16.msra.mxu0 0
    %735 = vmatprep.subr.bf16.mxu0 0
    %736 = vmatpush1.bf16.msra.mxu0 0
    %737 = vmatprep.subr.bf16.mxu0 0
    %738 = vmatpush1.bf16.msra.mxu0 0
    %739 = vmatprep.subr.bf16.mxu0 0
    %740 = vmatpush1.bf16.msra.mxu0 0
    %741 = vmatprep.subr.bf16.mxu0 0
    %742 = vmatpush1.bf16.msra.mxu0 0
    %743 = vmatprep.mubr.bf16.mxu0 0
    %744 = vmatmul.mubr.bf16.gmra.mrb[0].mxu0 %v706
    %v745 = vpop.f32.mrb[0].mxu0
    %v746 = vadd.f32 0.0, %v745
    %v747 = vpop.f32.mrb[0].mxu0
    %v748 = vpop.f32.mrb[0].mxu0
    %v749 = vadd.f32 0.0, %v748
    %v750 = vpop.f32.mrb[0].mxu0
    %751 = vdwg.mxu0
    %v752 = vpack.c.b16 %v97, %v97
    %753 = vrot.lane.b32.xlu0 %v752, 32
    %v754 = vpop.permute.xlu0 %753
    %v756 = vsel %vm256, %v470, 0
    %v759 = vsel %vm380, %v754, 0
    %761 = vmatprep.subr.bf16.mxu0 0
    %762 = vmatpush1.bf16.msra.mxu0 %v759
    %763 = vmatprep.subr.bf16.mxu0 0
    %764 = vmatpush1.bf16.msra.mxu0 0
    %765 = vmatprep.subr.bf16.mxu0 0
    %766 = vmatpush1.bf16.msra.mxu0 0
    %767 = vmatprep.subr.bf16.mxu0 0
    %768 = vmatpush1.bf16.msra.mxu0 0
    %769 = vmatprep.subr.bf16.mxu0 0
    %770 = vmatpush1.bf16.msra.mxu0 0
    %771 = vmatprep.subr.bf16.mxu0 0
    %772 = vmatpush1.bf16.msra.mxu0 0
    %773 = vmatprep.subr.bf16.mxu0 0
    %774 = vmatpush1.bf16.msra.mxu0 0
    %775 = vmatprep.subr.bf16.mxu0 0
    %776 = vmatpush1.bf16.msra.mxu0 0
    %777 = vmatprep.subr.bf16.mxu0 0
    %778 = vmatpush1.bf16.msra.mxu0 0
    %779 = vmatprep.subr.bf16.mxu0 0
    %780 = vmatpush1.bf16.msra.mxu0 0
    %781 = vmatprep.subr.bf16.mxu0 0
    %782 = vmatpush1.bf16.msra.mxu0 0
    %783 = vmatprep.subr.bf16.mxu0 0
    %784 = vmatpush1.bf16.msra.mxu0 0
    %785 = vmatprep.subr.bf16.mxu0 0
    %786 = vmatpush1.bf16.msra.mxu0 0
    %787 = vmatprep.subr.bf16.mxu0 0
    %788 = vmatpush1.bf16.msra.mxu0 0
    %789 = vmatprep.subr.bf16.mxu0 0
    %790 = vmatpush1.bf16.msra.mxu0 0
    %791 = vmatprep.subr.bf16.mxu0 0
    %792 = vmatpush1.bf16.msra.mxu0 0
    %793 = vmatprep.mubr.bf16.mxu0 0
    %794 = vmatmul.mubr.bf16.gmra.mrb[0].mxu0 %v756
    %v795 = vpop.f32.mrb[0].mxu0
    %v796 = vadd.f32 %v746, %v795
    %v797 = vpop.f32.mrb[0].mxu0
    %v798 = vpop.f32.mrb[0].mxu0
    %v799 = vadd.f32 %v749, %v798
    %v800 = vpop.f32.mrb[0].mxu0
    %801 = vdwg.mxu0
    %802 = vrot.lane.b32.xlu0 %v250, 112
    %v803 = vpop.permute.xlu0 %802
    %804 = vrot.lane.b32.xlu0 %v252, 112
    %v805 = vpop.permute.xlu0 %804
    %v807 = vsel %vm256, %v803, 0
    %v810 = vsel %vm256, %v805, 0
    %812 = vmatprep.subr.bf16.mxu0 0
    %813 = vmatpush1.bf16.xpose.msra.mxu0 %v810
    %814 = vmatprep.subr.bf16.mxu0 0
    %815 = vmatpush1.bf16.xpose.msra.mxu0 0
    %816 = vmatprep.subr.bf16.mxu0 0
    %817 = vmatpush1.bf16.xpose.msra.mxu0 0
    %818 = vmatprep.subr.bf16.mxu0 0
    %819 = vmatpush1.bf16.xpose.msra.mxu0 0
    %820 = vmatprep.subr.bf16.mxu0 0
    %821 = vmatpush1.bf16.xpose.msra.mxu0 0
    %822 = vmatprep.subr.bf16.mxu0 0
    %823 = vmatpush1.bf16.xpose.msra.mxu0 0
    %824 = vmatprep.subr.bf16.mxu0 0
    %825 = vmatpush1.bf16.xpose.msra.mxu0 0
    %826 = vmatprep.subr.bf16.mxu0 0
    %827 = vmatpush1.bf16.xpose.msra.mxu0 0
    %828 = vmatprep.subr.bf16.mxu0 0
    %829 = vmatpush1.bf16.xpose.msra.mxu0 0
    %830 = vmatprep.subr.bf16.mxu0 0
    %831 = vmatpush1.bf16.xpose.msra.mxu0 0
    %832 = vmatprep.subr.bf16.mxu0 0
    %833 = vmatpush1.bf16.xpose.msra.mxu0 0
    %834 = vmatprep.subr.bf16.mxu0 0
    %835 = vmatpush1.bf16.xpose.msra.mxu0 0
    %836 = vmatprep.subr.bf16.mxu0 0
    %837 = vmatpush1.bf16.xpose.msra.mxu0 0
    %838 = vmatprep.subr.bf16.mxu0 0
    %839 = vmatpush1.bf16.xpose.msra.mxu0 0
    %840 = vmatprep.subr.bf16.mxu0 0
    %841 = vmatpush1.bf16.xpose.msra.mxu0 0
    %842 = vmatprep.subr.bf16.mxu0 0
    %843 = vmatpush1.bf16.xpose.msra.mxu0 0
    %844 = vmatprep.mubr.bf16.mxu0 0
    %845 = vmatmul.mubr.bf16.gmra.mrb[0].mxu0 %v807
    %v846 = vpop.f32.mrb[0].mxu0
    %v847 = vadd.f32 0.0, %v846
    %v848 = vpop.f32.mrb[0].mxu0
    %v849 = vpop.f32.mrb[0].mxu0
    %v850 = vpop.f32.mrb[0].mxu0
    %851 = vdwg.mxu0
    %852 = vrot.lane.b32.xlu0 %v251, 112
    %v853 = vpop.permute.xlu0 %852
    %854 = vrot.lane.b32.xlu0 %v253, 112
    %v855 = vpop.permute.xlu0 %854
    %v857 = vsel %vm256, %v853, 0
    %v860 = vsel %vm256, %v855, 0
    %862 = vmatprep.subr.bf16.mxu0 0
    %863 = vmatpush1.bf16.xpose.msra.mxu0 %v860
    %864 = vmatprep.subr.bf16.mxu0 0
    %865 = vmatpush1.bf16.xpose.msra.mxu0 0
    %866 = vmatprep.subr.bf16.mxu0 0
    %867 = vmatpush1.bf16.xpose.msra.mxu0 0
    %868 = vmatprep.subr.bf16.mxu0 0
    %869 = vmatpush1.bf16.xpose.msra.mxu0 0
    %870 = vmatprep.subr.bf16.mxu0 0
    %871 = vmatpush1.bf16.xpose.msra.mxu0 0
    %872 = vmatprep.subr.bf16.mxu0 0
    %873 = vmatpush1.bf16.xpose.msra.mxu0 0
    %874 = vmatprep.subr.bf16.mxu0 0
    %875 = vmatpush1.bf16.xpose.msra.mxu0 0
    %876 = vmatprep.subr.bf16.mxu0 0
    %877 = vmatpush1.bf16.xpose.msra.mxu0 0
    %878 = vmatprep.subr.bf16.mxu0 0
    %879 = vmatpush1.bf16.xpose.msra.mxu0 0
    %880 = vmatprep.subr.bf16.mxu0 0
    %881 = vmatpush1.bf16.xpose.msra.mxu0 0
    %882 = vmatprep.subr.bf16.mxu0 0
    %883 = vmatpush1.bf16.xpose.msra.mxu0 0
    %884 = vmatprep.subr.bf16.mxu0 0
    %885 = vmatpush1.bf16.xpose.msra.mxu0 0
    %886 = vmatprep.subr.bf16.mxu0 0
    %887 = vmatpush1.bf16.xpose.msra.mxu0 0
    %888 = vmatprep.subr.bf16.mxu0 0
    %889 = vmatpush1.bf16.xpose.msra.mxu0 0
    %890 = vmatprep.subr.bf16.mxu0 0
    %891 = vmatpush1.bf16.xpose.msra.mxu0 0
    %892 = vmatprep.subr.bf16.mxu0 0
    %893 = vmatpush1.bf16.xpose.msra.mxu0 0
    %894 = vmatprep.mubr.bf16.mxu0 0
    %895 = vmatmul.mubr.bf16.gmra.mrb[0].mxu0 %v857
    %v896 = vpop.f32.mrb[0].mxu0
    %v897 = vadd.f32 0.0, %v896
    %v898 = vpop.f32.mrb[0].mxu0
    %v899 = vpop.f32.mrb[0].mxu0
    %v900 = vpop.f32.mrb[0].mxu0
    %901 = vdwg.mxu0
    %v902 = vmul.f32 %v847, 3.0517578e-05
    %v903 = vmul.f32 %v897, 3.0517578e-05
    %v904 = vadd.f32 %v577, %v902
    %v905 = vadd.f32 %v578, %v903
    %v906 = vsel %vm256, %v902, -inf
    %907 = vmax.xlane.f32.xlu0 %v906
    %v908 = vpop.xlane.xlu0 %907
    %v909 = vsel %vm256, %v903, -inf
    %910 = vmax.xlane.f32.xlu0 %v909
    %v911 = vpop.xlane.xlu0 %910
    %v912 = vsub.f32 %v902, %v908
    %v913 = vsub.f32 %v903, %v911
    %v914 = vmul.f32 %v912, 1.442695
    %v915 = vpow.pop %v914
    %v916 = vmul.f32 %v913, 1.442695
    %v917 = vpow.pop %v916
    %v918 = vsel %vm256, %v915, 0.0
    %919 = vadd.xlane.f32.xlu0 %v918
    %v920 = vpop.xlane.xlu0 %919
    %v921 = vsel %vm256, %v917, 0.0
    %922 = vadd.xlane.f32.xlu0 %v921
    %v923 = vpop.xlane.xlu0 %922
    %v924 = vrcp.pop %v920
    %v925 = vrcp.pop %v923
    %v926 = vmul.f32 %v915, %v924
    %v927 = vmul.f32 %v917, %v925
    %v928 = vpack.c.bf16 %v926, %v926
    %v929 = vpack.c.bf16 %v927, %v927
    %930 = vrot.lane.b32.xlu0 %v254, 112
    %v931 = vpop.permute.xlu0 %930
    %v933 = vsel %vm256, %v928, 0
    %v936 = vsel %vm380, %v931, 0
    %938 = vmatprep.subr.bf16.mxu0 0
    %939 = vmatpush1.bf16.msra.mxu0 %v936
    %940 = vmatprep.subr.bf16.mxu0 0
    %941 = vmatpush1.bf16.msra.mxu0 0
    %942 = vmatprep.subr.bf16.mxu0 0
    %943 = vmatpush1.bf16.msra.mxu0 0
    %944 = vmatprep.subr.bf16.mxu0 0
    %945 = vmatpush1.bf16.msra.mxu0 0
    %946 = vmatprep.subr.bf16.mxu0 0
    %947 = vmatpush1.bf16.msra.mxu0 0
    %948 = vmatprep.subr.bf16.mxu0 0
    %949 = vmatpush1.bf16.msra.mxu0 0
    %950 = vmatprep.subr.bf16.mxu0 0
    %951 = vmatpush1.bf16.msra.mxu0 0
    %952 = vmatprep.subr.bf16.mxu0 0
    %953 = vmatpush1.bf16.msra.mxu0 0
    %954 = vmatprep.subr.bf16.mxu0 0
    %955 = vmatpush1.bf16.msra.mxu0 0
    %956 = vmatprep.subr.bf16.mxu0 0
    %957 = vmatpush1.bf16.msra.mxu0 0
    %958 = vmatprep.subr.bf16.mxu0 0
    %959 = vmatpush1.bf16.msra.mxu0 0
    %960 = vmatprep.subr.bf16.mxu0 0
    %961 = vmatpush1.bf16.msra.mxu0 0
    %962 = vmatprep.subr.bf16.mxu0 0
    %963 = vmatpush1.bf16.msra.mxu0 0
    %964 = vmatprep.subr.bf16.mxu0 0
    %965 = vmatpush1.bf16.msra.mxu0 0
    %966 = vmatprep.subr.bf16.mxu0 0
    %967 = vmatpush1.bf16.msra.mxu0 0
    %968 = vmatprep.subr.bf16.mxu0 0
    %969 = vmatpush1.bf16.msra.mxu0 0
    %970 = vmatprep.mubr.bf16.mxu0 0
    %971 = vmatmul.mubr.bf16.gmra.mrb[0].mxu0 %v933
    %v972 = vpop.f32.mrb[0].mxu0
    %v973 = vadd.f32 0.0, %v972
    %v974 = vpop.f32.mrb[0].mxu0
    %v975 = vpop.f32.mrb[0].mxu0
    %v976 = vpop.f32.mrb[0].mxu0
    %977 = vdwg.mxu0
    %978 = vrot.lane.b32.xlu0 %v255, 112
    %v979 = vpop.permute.xlu0 %978
    %v981 = vsel %vm256, %v929, 0
    %v984 = vsel %vm380, %v979, 0
    %986 = vmatprep.subr.bf16.mxu0 0
    %987 = vmatpush1.bf16.msra.mxu0 %v984
    %988 = vmatprep.subr.bf16.mxu0 0
    %989 = vmatpush1.bf16.msra.mxu0 0
    %990 = vmatprep.subr.bf16.mxu0 0
    %991 = vmatpush1.bf16.msra.mxu0 0
    %992 = vmatprep.subr.bf16.mxu0 0
    %993 = vmatpush1.bf16.msra.mxu0 0
    %994 = vmatprep.subr.bf16.mxu0 0
    %995 = vmatpush1.bf16.msra.mxu0 0
    %996 = vmatprep.subr.bf16.mxu0 0
    %997 = vmatpush1.bf16.msra.mxu0 0
    %998 = vmatprep.subr.bf16.mxu0 0
    %999 = vmatpush1.bf16.msra.mxu0 0
    %1000 = vmatprep.subr.bf16.mxu0 0
    %1001 = vmatpush1.bf16.msra.mxu0 0
    %1002 = vmatprep.subr.bf16.mxu0 0
    %1003 = vmatpush1.bf16.msra.mxu0 0
    %1004 = vmatprep.subr.bf16.mxu0 0
    %1005 = vmatpush1.bf16.msra.mxu0 0
    %1006 = vmatprep.subr.bf16.mxu0 0
    %1007 = vmatpush1.bf16.msra.mxu0 0
    %1008 = vmatprep.subr.bf16.mxu0 0
    %1009 = vmatpush1.bf16.msra.mxu0 0
    %1010 = vmatprep.subr.bf16.mxu0 0
    %1011 = vmatpush1.bf16.msra.mxu0 0
    %1012 = vmatprep.subr.bf16.mxu0 0
    %1013 = vmatpush1.bf16.msra.mxu0 0
    %1014 = vmatprep.subr.bf16.mxu0 0
    %1015 = vmatpush1.bf16.msra.mxu0 0
    %1016 = vmatprep.subr.bf16.mxu0 0
    %1017 = vmatpush1.bf16.msra.mxu0 0
    %1018 = vmatprep.mubr.bf16.mxu0 0
    %1019 = vmatmul.mubr.bf16.gmra.mrb[0].mxu0 %v981
    %v1020 = vpop.f32.mrb[0].mxu0
    %v1021 = vadd.f32 0.0, %v1020
    %v1022 = vpop.f32.mrb[0].mxu0
    %v1023 = vpop.f32.mrb[0].mxu0
    %v1024 = vpop.f32.mrb[0].mxu0
    %1025 = vdwg.mxu0
    %v1026 = vpack.c.bf16 %v1021, %v973
    %v1027 = vpack.c.b16 %v99, %v99
    %1028 = vrot.lane.b32.xlu0 %v1027, 32
    %v1029 = vpop.permute.xlu0 %1028
    %v1031 = vsel %vm256, %v1026, 0
    %v1034 = vsel %vm380, %v1029, 0
    %1036 = vmatprep.subr.bf16.mxu0 0
    %1037 = vmatpush1.bf16.msra.mxu0 %v1034
    %1038 = vmatprep.subr.bf16.mxu0 0
    %1039 = vmatpush1.bf16.msra.mxu0 0
    %1040 = vmatprep.subr.bf16.mxu0 0
    %1041 = vmatpush1.bf16.msra.mxu0 0
    %1042 = vmatprep.subr.bf16.mxu0 0
    %1043 = vmatpush1.bf16.msra.mxu0 0
    %1044 = vmatprep.subr.bf16.mxu0 0
    %1045 = vmatpush1.bf16.msra.mxu0 0
    %1046 = vmatprep.subr.bf16.mxu0 0
    %1047 = vmatpush1.bf16.msra.mxu0 0
    %1048 = vmatprep.subr.bf16.mxu0 0
    %1049 = vmatpush1.bf16.msra.mxu0 0
    %1050 = vmatprep.subr.bf16.mxu0 0
    %1051 = vmatpush1.bf16.msra.mxu0 0
    %1052 = vmatprep.subr.bf16.mxu0 0
    %1053 = vmatpush1.bf16.msra.mxu0 0
    %1054 = vmatprep.subr.bf16.mxu0 0
    %1055 = vmatpush1.bf16.msra.mxu0 0
    %1056 = vmatprep.subr.bf16.mxu0 0
    %1057 = vmatpush1.bf16.msra.mxu0 0
    %1058 = vmatprep.subr.bf16.mxu0 0
    %1059 = vmatpush1.bf16.msra.mxu0 0
    %1060 = vmatprep.subr.bf16.mxu0 0
    %1061 = vmatpush1.bf16.msra.mxu0 0
    %1062 = vmatprep.subr.bf16.mxu0 0
    %1063 = vmatpush1.bf16.msra.mxu0 0
    %1064 = vmatprep.subr.bf16.mxu0 0
    %1065 = vmatpush1.bf16.msra.mxu0 0
    %1066 = vmatprep.subr.bf16.mxu0 0
    %1067 = vmatpush1.bf16.msra.mxu0 0
    %1068 = vmatprep.mubr.bf16.mxu0 0
    %1069 = vmatmul.mubr.bf16.gmra.mrb[0].mxu0 %v1031
    %v1070 = vpop.f32.mrb[0].mxu0
    %v1071 = vadd.f32 0.0, %v1070
    %v1072 = vpop.f32.mrb[0].mxu0
    %v1073 = vpop.f32.mrb[0].mxu0
    %v1074 = vadd.f32 0.0, %v1073
    %v1075 = vpop.f32.mrb[0].mxu0
    %1076 = vdwg.mxu0
    %v1077 = vadd.f32 %v796, %v1071
    %v1078 = vadd.f32 %v799, %v1074
    %1079 = vrot.lane.b32.xlu0 %v250, 104
    %v1080 = vpop.permute.xlu0 %1079
    %1081 = vrot.lane.b32.xlu0 %v252, 104
    %v1082 = vpop.permute.xlu0 %1081
    %v1084 = vsel %vm256, %v1080, 0
    %v1087 = vsel %vm256, %v1082, 0
    %1089 = vmatprep.subr.bf16.mxu0 0
    %1090 = vmatpush1.bf16.xpose.msra.mxu0 %v1087
    %1091 = vmatprep.subr.bf16.mxu0 0
    %1092 = vmatpush1.bf16.xpose.msra.mxu0 0
    %1093 = vmatprep.subr.bf16.mxu0 0
    %1094 = vmatpush1.bf16.xpose.msra.mxu0 0
    %1095 = vmatprep.subr.bf16.mxu0 0
    %1096 = vmatpush1.bf16.xpose.msra.mxu0 0
    %1097 = vmatprep.subr.bf16.mxu0 0
    %1098 = vmatpush1.bf16.xpose.msra.mxu0 0
    %1099 = vmatprep.subr.bf16.mxu0 0
    %1100 = vmatpush1.bf16.xpose.msra.mxu0 0
    %1101 = vmatprep.subr.bf16.mxu0 0
    %1102 = vmatpush1.bf16.xpose.msra.mxu0 0
    %1103 = vmatprep.subr.bf16.mxu0 0
    %1104 = vmatpush1.bf16.xpose.msra.mxu0 0
    %1105 = vmatprep.subr.bf16.mxu0 0
    %1106 = vmatpush1.bf16.xpose.msra.mxu0 0
    %1107 = vmatprep.subr.bf16.mxu0 0
    %1108 = vmatpush1.bf16.xpose.msra.mxu0 0
    %1109 = vmatprep.subr.bf16.mxu0 0
    %1110 = vmatpush1.bf16.xpose.msra.mxu0 0
    %1111 = vmatprep.subr.bf16.mxu0 0
    %1112 = vmatpush1.bf16.xpose.msra.mxu0 0
    %1113 = vmatprep.subr.bf16.mxu0 0
    %1114 = vmatpush1.bf16.xpose.msra.mxu0 0
    %1115 = vmatprep.subr.bf16.mxu0 0
    %1116 = vmatpush1.bf16.xpose.msra.mxu0 0
    %1117 = vmatprep.subr.bf16.mxu0 0
    %1118 = vmatpush1.bf16.xpose.msra.mxu0 0
    %1119 = vmatprep.subr.bf16.mxu0 0
    %1120 = vmatpush1.bf16.xpose.msra.mxu0 0
    %1121 = vmatprep.mubr.bf16.mxu0 0
    %1122 = vmatmul.mubr.bf16.gmra.mrb[0].mxu0 %v1084
    %v1123 = vpop.f32.mrb[0].mxu0
    %v1124 = vadd.f32 0.0, %v1123
    %v1125 = vpop.f32.mrb[0].mxu0
    %v1126 = vpop.f32.mrb[0].mxu0
    %v1127 = vpop.f32.mrb[0].mxu0
    %1128 = vdwg.mxu0
    %1129 = vrot.lane.b32.xlu0 %v251, 104
    %v1130 = vpop.permute.xlu0 %1129
    %1131 = vrot.lane.b32.xlu0 %v253, 104
    %v1132 = vpop.permute.xlu0 %1131
    %v1134 = vsel %vm256, %v1130, 0
    %v1137 = vsel %vm256, %v1132, 0
    %1139 = vmatprep.subr.bf16.mxu0 0
    %1140 = vmatpush1.bf16.xpose.msra.mxu0 %v1137
    %1141 = vmatprep.subr.bf16.mxu0 0
    %1142 = vmatpush1.bf16.xpose.msra.mxu0 0
    %1143 = vmatprep.subr.bf16.mxu0 0
    %1144 = vmatpush1.bf16.xpose.msra.mxu0 0
    %1145 = vmatprep.subr.bf16.mxu0 0
    %1146 = vmatpush1.bf16.xpose.msra.mxu0 0
    %1147 = vmatprep.subr.bf16.mxu0 0
    %1148 = vmatpush1.bf16.xpose.msra.mxu0 0
    %1149 = vmatprep.subr.bf16.mxu0 0
    %1150 = vmatpush1.bf16.xpose.msra.mxu0 0
    %1151 = vmatprep.subr.bf16.mxu0 0
    %1152 = vmatpush1.bf16.xpose.msra.mxu0 0
    %1153 = vmatprep.subr.bf16.mxu0 0
    %1154 = vmatpush1.bf16.xpose.msra.mxu0 0
    %1155 = vmatprep.subr.bf16.mxu0 0
    %1156 = vmatpush1.bf16.xpose.msra.mxu0 0
    %1157 = vmatprep.subr.bf16.mxu0 0
    %1158 = vmatpush1.bf16.xpose.msra.mxu0 0
    %1159 = vmatprep.subr.bf16.mxu0 0
    %1160 = vmatpush1.bf16.xpose.msra.mxu0 0
    %1161 = vmatprep.subr.bf16.mxu0 0
    %1162 = vmatpush1.bf16.xpose.msra.mxu0 0
    %1163 = vmatprep.subr.bf16.mxu0 0
    %1164 = vmatpush1.bf16.xpose.msra.mxu0 0
    %1165 = vmatprep.subr.bf16.mxu0 0
    %1166 = vmatpush1.bf16.xpose.msra.mxu0 0
    %1167 = vmatprep.subr.bf16.mxu0 0
    %1168 = vmatpush1.bf16.xpose.msra.mxu0 0
    %1169 = vmatprep.subr.bf16.mxu0 0
    %1170 = vmatpush1.bf16.xpose.msra.mxu0 0
    %1171 = vmatprep.mubr.bf16.mxu0 0
    %1172 = vmatmul.mubr.bf16.gmra.mrb[0].mxu0 %v1134
    %v1173 = vpop.f32.mrb[0].mxu0
    %v1174 = vadd.f32 0.0, %v1173
    %v1175 = vpop.f32.mrb[0].mxu0
    %v1176 = vpop.f32.mrb[0].mxu0
    %v1177 = vpop.f32.mrb[0].mxu0
    %1178 = vdwg.mxu0
    %v1179 = vmul.f32 %v1124, 3.0517578e-05
    %v1180 = vmul.f32 %v1174, 3.0517578e-05
    %v1181 = vadd.f32 %v904, %v1179
    %v1182 = vadd.f32 %v905, %v1180
    %v1183 = vsel %vm256, %v1179, -inf
    %1184 = vmax.xlane.f32.xlu0 %v1183
    %v1185 = vpop.xlane.xlu0 %1184
    %v1186 = vsel %vm256, %v1180, -inf
    %1187 = vmax.xlane.f32.xlu0 %v1186
    %v1188 = vpop.xlane.xlu0 %1187
    %v1189 = vsub.f32 %v1179, %v1185
    %v1190 = vsub.f32 %v1180, %v1188
    %v1191 = vmul.f32 %v1189, 1.442695
    %v1192 = vpow.pop %v1191
    %v1193 = vmul.f32 %v1190, 1.442695
    %v1194 = vpow.pop %v1193
    %v1195 = vsel %vm256, %v1192, 0.0
    %1196 = vadd.xlane.f32.xlu0 %v1195
    %v1197 = vpop.xlane.xlu0 %1196
    %v1198 = vsel %vm256, %v1194, 0.0
    %1199 = vadd.xlane.f32.xlu0 %v1198
    %v1200 = vpop.xlane.xlu0 %1199
    %v1201 = vrcp.pop %v1197
    %v1202 = vrcp.pop %v1200
    %v1203 = vmul.f32 %v1192, %v1201
    %v1204 = vmul.f32 %v1194, %v1202
    %v1205 = vpack.c.bf16 %v1203, %v1203
    %v1206 = vpack.c.bf16 %v1204, %v1204
    %1207 = vrot.lane.b32.xlu0 %v254, 104
    %v1208 = vpop.permute.xlu0 %1207
    %v1210 = vsel %vm256, %v1205, 0
    %v1213 = vsel %vm380, %v1208, 0
    %1215 = vmatprep.subr.bf16.mxu0 0
    %1216 = vmatpush1.bf16.msra.mxu0 %v1213
    %1217 = vmatprep.subr.bf16.mxu0 0
    %1218 = vmatpush1.bf16.msra.mxu0 0
    %1219 = vmatprep.subr.bf16.mxu0 0
    %1220 = vmatpush1.bf16.msra.mxu0 0
    %1221 = vmatprep.subr.bf16.mxu0 0
    %1222 = vmatpush1.bf16.msra.mxu0 0
    %1223 = vmatprep.subr.bf16.mxu0 0
    %1224 = vmatpush1.bf16.msra.mxu0 0
    %1225 = vmatprep.subr.bf16.mxu0 0
    %1226 = vmatpush1.bf16.msra.mxu0 0
    %1227 = vmatprep.subr.bf16.mxu0 0
    %1228 = vmatpush1.bf16.msra.mxu0 0
    %1229 = vmatprep.subr.bf16.mxu0 0
    %1230 = vmatpush1.bf16.msra.mxu0 0
    %1231 = vmatprep.subr.bf16.mxu0 0
    %1232 = vmatpush1.bf16.msra.mxu0 0
    %1233 = vmatprep.subr.bf16.mxu0 0
    %1234 = vmatpush1.bf16.msra.mxu0 0
    %1235 = vmatprep.subr.bf16.mxu0 0
    %1236 = vmatpush1.bf16.msra.mxu0 0
    %1237 = vmatprep.subr.bf16.mxu0 0
    %1238 = vmatpush1.bf16.msra.mxu0 0
    %1239 = vmatprep.subr.bf16.mxu0 0
    %1240 = vmatpush1.bf16.msra.mxu0 0
    %1241 = vmatprep.subr.bf16.mxu0 0
    %1242 = vmatpush1.bf16.msra.mxu0 0
    %1243 = vmatprep.subr.bf16.mxu0 0
    %1244 = vmatpush1.bf16.msra.mxu0 0
    %1245 = vmatprep.subr.bf16.mxu0 0
    %1246 = vmatpush1.bf16.msra.mxu0 0
    %1247 = vmatprep.mubr.bf16.mxu0 0
    %1248 = vmatmul.mubr.bf16.gmra.mrb[0].mxu0 %v1210
    %v1249 = vpop.f32.mrb[0].mxu0
    %v1250 = vadd.f32 0.0, %v1249
    %v1251 = vpop.f32.mrb[0].mxu0
    %v1252 = vpop.f32.mrb[0].mxu0
    %v1253 = vpop.f32.mrb[0].mxu0
    %1254 = vdwg.mxu0
    %1255 = vrot.lane.b32.xlu0 %v255, 104
    %v1256 = vpop.permute.xlu0 %1255
    %v1258 = vsel %vm256, %v1206, 0
    %v1261 = vsel %vm380, %v1256, 0
    %1263 = vmatprep.subr.bf16.mxu0 0
    %1264 = vmatpush1.bf16.msra.mxu0 %v1261
    %1265 = vmatprep.subr.bf16.mxu0 0
    %1266 = vmatpush1.bf16.msra.mxu0 0
    %1267 = vmatprep.subr.bf16.mxu0 0
    %1268 = vmatpush1.bf16.msra.mxu0 0
    %1269 = vmatprep.subr.bf16.mxu0 0
    %1270 = vmatpush1.bf16.msra.mxu0 0
    %1271 = vmatprep.subr.bf16.mxu0 0
    %1272 = vmatpush1.bf16.msra.mxu0 0
    %1273 = vmatprep.subr.bf16.mxu0 0
    %1274 = vmatpush1.bf16.msra.mxu0 0
    %1275 = vmatprep.subr.bf16.mxu0 0
    %1276 = vmatpush1.bf16.msra.mxu0 0
    %1277 = vmatprep.subr.bf16.mxu0 0
    %1278 = vmatpush1.bf16.msra.mxu0 0
    %1279 = vmatprep.subr.bf16.mxu0 0
    %1280 = vmatpush1.bf16.msra.mxu0 0
    %1281 = vmatprep.subr.bf16.mxu0 0
    %1282 = vmatpush1.bf16.msra.mxu0 0
    %1283 = vmatprep.subr.bf16.mxu0 0
    %1284 = vmatpush1.bf16.msra.mxu0 0
    %1285 = vmatprep.subr.bf16.mxu0 0
    %1286 = vmatpush1.bf16.msra.mxu0 0
    %1287 = vmatprep.subr.bf16.mxu0 0
    %1288 = vmatpush1.bf16.msra.mxu0 0
    %1289 = vmatprep.subr.bf16.mxu0 0
    %1290 = vmatpush1.bf16.msra.mxu0 0
    %1291 = vmatprep.subr.bf16.mxu0 0
    %1292 = vmatpush1.bf16.msra.mxu0 0
    %1293 = vmatprep.subr.bf16.mxu0 0
    %1294 = vmatpush1.bf16.msra.mxu0 0
    %1295 = vmatprep.mubr.bf16.mxu0 0
    %1296 = vmatmul.mubr.bf16.gmra.mrb[0].mxu0 %v1258
    %v1297 = vpop.f32.mrb[0].mxu0
    %v1298 = vadd.f32 0.0, %v1297
    %v1299 = vpop.f32.mrb[0].mxu0
    %v1300 = vpop.f32.mrb[0].mxu0
    %v1301 = vpop.f32.mrb[0].mxu0
    %1302 = vdwg.mxu0
    %v1303 = vpack.c.bf16 %v1298, %v1250
    %v1304 = vpack.c.b16 %v100, %v100
    %1305 = vrot.lane.b32.xlu0 %v1304, 32
    %v1306 = vpop.permute.xlu0 %1305
    %v1308 = vsel %vm256, %v1303, 0
    %v1311 = vsel %vm380, %v1306, 0
    %1313 = vmatprep.subr.bf16.mxu0 0
    %1314 = vmatpush1.bf16.msra.mxu0 %v1311
    %1315 = vmatprep.subr.bf16.mxu0 0
    %1316 = vmatpush1.bf16.msra.mxu0 0
    %1317 = vmatprep.subr.bf16.mxu0 0
    %1318 = vmatpush1.bf16.msra.mxu0 0
    %1319 = vmatprep.subr.bf16.mxu0 0
    %1320 = vmatpush1.bf16.msra.mxu0 0
    %1321 = vmatprep.subr.bf16.mxu0 0
    %1322 = vmatpush1.bf16.msra.mxu0 0
    %1323 = vmatprep.subr.bf16.mxu0 0
    %1324 = vmatpush1.bf16.msra.mxu0 0
    %1325 = vmatprep.subr.bf16.mxu0 0
    %1326 = vmatpush1.bf16.msra.mxu0 0
    %1327 = vmatprep.subr.bf16.mxu0 0
    %1328 = vmatpush1.bf16.msra.mxu0 0
    %1329 = vmatprep.subr.bf16.mxu0 0
    %1330 = vmatpush1.bf16.msra.mxu0 0
    %1331 = vmatprep.subr.bf16.mxu0 0
    %1332 = vmatpush1.bf16.msra.mxu0 0
    %1333 = vmatprep.subr.bf16.mxu0 0
    %1334 = vmatpush1.bf16.msra.mxu0 0
    %1335 = vmatprep.subr.bf16.mxu0 0
    %1336 = vmatpush1.bf16.msra.mxu0 0
    %1337 = vmatprep.subr.bf16.mxu0 0
    %1338 = vmatpush1.bf16.msra.mxu0 0
    %1339 = vmatprep.subr.bf16.mxu0 0
    %1340 = vmatpush1.bf16.msra.mxu0 0
    %1341 = vmatprep.subr.bf16.mxu0 0
    %1342 = vmatpush1.bf16.msra.mxu0 0
    %1343 = vmatprep.subr.bf16.mxu0 0
    %1344 = vmatpush1.bf16.msra.mxu0 0
    %1345 = vmatprep.mubr.bf16.mxu0 0
    %1346 = vmatmul.mubr.bf16.gmra.mrb[0].mxu0 %v1308
    %v1347 = vpop.f32.mrb[0].mxu0
    %v1348 = vadd.f32 0.0, %v1347
    %v1349 = vpop.f32.mrb[0].mxu0
    %v1350 = vpop.f32.mrb[0].mxu0
    %v1351 = vadd.f32 0.0, %v1350
    %v1352 = vpop.f32.mrb[0].mxu0
    %1353 = vdwg.mxu0
    %v1354 = vadd.f32 %v1077, %v1348
    %v1355 = vadd.f32 %v1078, %v1351
    %v1356 = vld [vmem:[%s4] sm:$0x1]
    %v1358 = vlaneseq
    %v1359 = vshrl.u32 %v1358, 7
    %v1360 = vsub.s32 0, %v1359
    %v1361 = vrot.slane %v1356, %v1360
    %v1363 = vadd.f32 %v1354, %v1361
    %v1364 = vadd.f32 %v1355, %v1361
    %v1365 = vmul.f32 %v1181, 0.25
    %v1366 = vmul.f32 %v1182, 0.25
    %v1368 = vrot.slane %v1363, 1
    %1369 = vrot.lane.b32.xlu0 %v1368, 32
    %v1370 = vpop.permute.xlu0 %1369
    %v1372 = vrot.slane %v1363, 2
    %1373 = vrot.lane.b32.xlu0 %v1372, 64
    %v1374 = vpop.permute.xlu0 %1373
    %v1376 = vrot.slane %v1363, 3
    %1377 = vrot.lane.b32.xlu0 %v1376, 96
    %v1378 = vpop.permute.xlu0 %1377
    %v1380 = vrot.slane %v1363, 4
    %v1382 = vrot.slane %v1363, 5
    %1383 = vrot.lane.b32.xlu0 %v1382, 32
    %v1384 = vpop.permute.xlu0 %1383
    %v1386 = vrot.slane %v1363, 6
    %1387 = vrot.lane.b32.xlu0 %v1386, 64
    %v1388 = vpop.permute.xlu0 %1387
    %v1390 = vrot.slane %v1363, 7
    %1391 = vrot.lane.b32.xlu0 %v1390, 96
    %v1392 = vpop.permute.xlu0 %1391
    %v1395 = vrot.slane %v1364, 1
    %1396 = vrot.lane.b32.xlu0 %v1395, 32
    %v1397 = vpop.permute.xlu0 %1396
    %v1399 = vrot.slane %v1364, 2
    %1400 = vrot.lane.b32.xlu0 %v1399, 64
    %v1401 = vpop.permute.xlu0 %1400
    %v1403 = vrot.slane %v1364, 3
    %1404 = vrot.lane.b32.xlu0 %v1403, 96
    %v1405 = vpop.permute.xlu0 %1404
    %v1407 = vrot.slane %v1364, 4
    %v1409 = vrot.slane %v1364, 5
    %1410 = vrot.lane.b32.xlu0 %v1409, 32
    %v1411 = vpop.permute.xlu0 %1410
    %v1413 = vrot.slane %v1364, 6
    %1414 = vrot.lane.b32.xlu0 %v1413, 64
    %v1415 = vpop.permute.xlu0 %1414
    %v1417 = vrot.slane %v1364, 7
    %1418 = vrot.lane.b32.xlu0 %v1417, 96
    %v1419 = vpop.permute.xlu0 %1418
    %v1421 = vsel %vm105, %v1363, %v1370
    %vm1422 = vcmask 523264
    %v1423 = vsel %vm1422, %v1421, %v1374
    %vm1424 = vcmask 785408
    %v1425 = vsel %vm1424, %v1423, %v1378
    %v1426 = vsel %vm105, %v1380, %v1384
    %v1427 = vsel %vm1422, %v1426, %v1388
    %v1428 = vsel %vm1424, %v1427, %v1392
    %v1429 = vsel %vm105, %v1364, %v1397
    %v1430 = vsel %vm1422, %v1429, %v1401
    %v1431 = vsel %vm1424, %v1430, %v1405
    %v1432 = vsel %vm105, %v1407, %v1411
    %v1433 = vsel %vm1422, %v1432, %v1415
    %v1434 = vsel %vm1424, %v1433, %v1419
    %v1439 = vcombine.low %v1425, %v1428
    %v1440 = vcombine.low %v1431, %v1434
    %v1442 = vunpack.c.l.s4 1966171168
    %v1443 = vunpack.c.0.s8 %v1442
    %v1444 = vlaneseq
    %v1445 = vshrl.u32 %v1444, 7
    %v1446 = vsub.s32 %v1443, %v1445
    %v1447 = vrot.slane %v1439, %v1446
    %v1449 = vunpack.c.l.s4 1966171168
    %v1450 = vunpack.c.0.s8 %v1449
    %v1451 = vlaneseq
    %v1452 = vshrl.u32 %v1451, 7
    %v1453 = vsub.s32 %v1450, %v1452
    %v1454 = vrot.slane %v1440, %v1453
    %v1455 = vcombine.low %v1447, %v1454
    %v1457 = vunpack.c.l.s4 1966171168
    %v1458 = vunpack.c.0.s8 %v1457
    %v1459 = vlaneseq
    %v1460 = vshrl.u32 %v1459, 7
    %v1461 = vsub.s32 %v1458, %v1460
    %v1462 = vrot.slane %v1455, %v1461
    %v1464 = vlaneseq
    %vm1465 = vcmp.ge.s32.totalorder %v1464, 0
    %vm1466 = vcmp.lt.s32.totalorder %v1464, 512
    %vm1467 = vmand %vm1465, %vm1466
    %1468 = vst.msk [vmem:[#allocation10] sm:$0xf] %vm1467, %v1462
    %v1470 = vrot.slane %v1365, 1
    %1471 = vrot.lane.b32.xlu0 %v1470, 8
    %v1472 = vpop.permute.xlu0 %1471
    %v1474 = vrot.slane %v1365, 2
    %1475 = vrot.lane.b32.xlu0 %v1474, 16
    %v1476 = vpop.permute.xlu0 %1475
    %v1478 = vrot.slane %v1365, 3
    %1479 = vrot.lane.b32.xlu0 %v1478, 24
    %v1480 = vpop.permute.xlu0 %1479
    %v1482 = vrot.slane %v1365, 4
    %1483 = vrot.lane.b32.xlu0 %v1482, 32
    %v1484 = vpop.permute.xlu0 %1483
    %v1486 = vrot.slane %v1365, 5
    %1487 = vrot.lane.b32.xlu0 %v1486, 40
    %v1488 = vpop.permute.xlu0 %1487
    %v1490 = vrot.slane %v1365, 6
    %1491 = vrot.lane.b32.xlu0 %v1490, 48
    %v1492 = vpop.permute.xlu0 %1491
    %v1494 = vrot.slane %v1365, 7
    %1495 = vrot.lane.b32.xlu0 %v1494, 56
    %v1496 = vpop.permute.xlu0 %1495
    %1499 = vrot.lane.b32.xlu0 %v1366, 64
    %v1500 = vpop.permute.xlu0 %1499
    %v1502 = vrot.slane %v1366, 1
    %1503 = vrot.lane.b32.xlu0 %v1502, 72
    %v1504 = vpop.permute.xlu0 %1503
    %v1506 = vrot.slane %v1366, 2
    %1507 = vrot.lane.b32.xlu0 %v1506, 80
    %v1508 = vpop.permute.xlu0 %1507
    %v1510 = vrot.slane %v1366, 3
    %1511 = vrot.lane.b32.xlu0 %v1510, 88
    %v1512 = vpop.permute.xlu0 %1511
    %v1514 = vrot.slane %v1366, 4
    %1515 = vrot.lane.b32.xlu0 %v1514, 96
    %v1516 = vpop.permute.xlu0 %1515
    %v1518 = vrot.slane %v1366, 5
    %1519 = vrot.lane.b32.xlu0 %v1518, 104
    %v1520 = vpop.permute.xlu0 %1519
    %v1522 = vrot.slane %v1366, 6
    %1523 = vrot.lane.b32.xlu0 %v1522, 112
    %v1524 = vpop.permute.xlu0 %1523
    %v1526 = vrot.slane %v1366, 7
    %1527 = vrot.lane.b32.xlu0 %v1526, 120
    %v1528 = vpop.permute.xlu0 %1527
    %v1530 = vsel %vm256, %v1365, %v1472
    %vm1531 = vcmask 130048
    %v1532 = vsel %vm1531, %v1530, %v1476
    %vm1533 = vcmask 195584
    %v1534 = vsel %vm1533, %v1532, %v1480
    %v1535 = vsel %vm105, %v1534, %v1484
    %vm1536 = vcmask 326656
    %v1537 = vsel %vm1536, %v1535, %v1488
    %vm1538 = vcmask 392192
    %v1539 = vsel %vm1538, %v1537, %v1492
    %vm1540 = vcmask 457728
    %v1541 = vsel %vm1540, %v1539, %v1496
    %v1542 = vsel %vm1422, %v1541, %v1500
    %vm1543 = vcmask 588800
    %v1544 = vsel %vm1543, %v1542, %v1504
    %vm1545 = vcmask 654336
    %v1546 = vsel %vm1545, %v1544, %v1508
    %vm1547 = vcmask 719872
    %v1548 = vsel %vm1547, %v1546, %v1512
    %v1549 = vsel %vm1424, %v1548, %v1516
    %vm1550 = vcmask 850944
    %v1551 = vsel %vm1550, %v1549, %v1520
    %vm1552 = vcmask 916480
    %v1553 = vsel %vm1552, %v1551, %v1524
    %vm1554 = vcmask 982016
    %v1555 = vsel %vm1554, %v1553, %v1528
    %1556 = vst [vmem:[#allocation11] sm:$0x1] %v1555
    // Predicated region
    $region38: #{tpu_custom_call.1} parent=1 // pred_check
      _
    $region39: #{tpu_custom_call.1} parent=1 // pred_check_branch
      %1558 = sbr.rel (0) target = $region41
    $region40: #{tpu_custom_call.1} parent=1 // pred_region
      %s1560 = ssub.s32 64, 64
      %1561 = vsyncadd [#allocation4], %s1560
      %s1563 = sshll.u32 [#allocation10], 4
      %s1564 = int_to_ptr.vmem [resolvable:$true] %s1563
      %1566 = dma.vmem_to_hbm [thread:$0]  %s1564, 64, %s5, [#allocation4]
    $region41: #{tpu_custom_call.1} parent=1 // pred_fallthru
      _
    // Predicated region
    $region42: #{tpu_custom_call.1} parent=1 // pred_check
      _
    $region43: #{tpu_custom_call.1} parent=1 // pred_check_branch
      %1568 = sbr.rel (0) target = $region45
    $region44: #{tpu_custom_call.1} parent=1 // pred_region
      %s1570 = ssub.s32 16, 16
      %1571 = vsyncadd [#allocation12], %s1570
      %s1573 = sshll.u32 [#allocation11], 4
      %s1574 = int_to_ptr.vmem [resolvable:$true] %s1573
      %1576 = dma.vmem_to_hbm [thread:$0]  %s1574, 16, %s6, [#allocation12]
    $region45: #{tpu_custom_call.1} parent=1 // pred_fallthru
      _
    // Predicated region
    $region46: #{tpu_custom_call.1} parent=1 // pred_check
      _
    $region47: #{tpu_custom_call.1} parent=1 // pred_check_branch
      %1578 = sbr.rel (0) target = $region49
    $region48: #{tpu_custom_call.1} parent=1 // pred_region
      %1579 = dma.done [#allocation4], 64
    $region49: #{tpu_custom_call.1} parent=1 // pred_fallthru
      _
    // Predicated region
    $region50: #{tpu_custom_call.1} parent=1 // pred_check
      _
    $region51: #{tpu_custom_call.1} parent=1 // pred_check_branch
      %1581 = sbr.rel (0) target = $region53
    $region52: #{tpu_custom_call.1} parent=1 // pred_region
      %1582 = dma.done [#allocation12], 16
    $region53: #{tpu_custom_call.1} parent=1 // pred_fallthru
      _
    %1583 = vsyncpa [#allocation3], 1
    %1584 = vsyncpa [#allocation6], 1
    %1585 = vsyncpa [#allocation9], 1
    %1586 = vsyncpa [#allocation4], 1
    %1587 = vsyncpa [#allocation12], 1

</llo_original>
